<compile_context>
chip_gen: v6e
topology: v6e:2x2x1
jax: 0.10.0
libtpu: 0.0.40
codegen_flags: <defaults>
</compile_context>

<pallas_src>
import jax
import jax.numpy as jnp
from jax import lax
from jax.experimental import pallas as pl
from jax.experimental.pallas import tpu as pltpu  # noqa: F401  (TPU backend)


# ----------------------------------------------------------------------------
# Fused kernel: feature extraction (x and y stacked) + pairwise distance +
# min/max normalization, in a single launch.
# ----------------------------------------------------------------------------
def _fused_kernel(xy_ref, w1_ref, b1_ref, w2_ref, b2_ref, out_ref):
    """
    xy_ref : (2B, C, HW)  x and y stacked on the batch axis, HW on lanes
    w1_ref : (C, F, 1)    1x1-conv weight, one (F, 1) slab per input channel
    b1_ref : (F, 1)       conv bias
    w2_ref : (F, D)       projection weight, pre-scaled by 1/HW (pool folded in)
    b2_ref : (1, D)       projection bias
    out_ref: (B, B)       normalized pairwise distance matrix
    """
    B = out_ref.shape[0]
    C = xy_ref.shape[1]
    HW = xy_ref.shape[2]

    # --- feature extractor, ONE pass over the stacked (2B, ...) batch -------
    # 1x1 conv as C broadcast multiply-adds on the VPU (K=C=4 would waste the
    # MXU). Each channel row is loaded straight from the ref; w1_ref[c] is a
    # tiny (F, 1) slab broadcast over batch and lanes (each emitted once).
    acc = xy_ref[:, 0:1, :] * w1_ref[0]                     # (2B, F, HW)
    for c in range(1, C):                                   # static, unrolled
        acc = acc + xy_ref[:, c:c + 1, :] * w1_ref[c]
    h = jnp.maximum(acc + b1_ref[...], 0.0)                 # bias + ReLU

    # Global average pool: fold the two 128-lane halves with a VALU add, then
    # one cross-lane sum (halves XLU reduction work); 1/HW is folded into w2.
    if HW % 256 == 0:
        half = HW // 2
        h = h[:, :, :half] + h[:, :, half:]
    pooled = jnp.sum(h, axis=-1)                            # (2B, F)

    f = jnp.dot(pooled, w2_ref[...],
                preferred_element_type=jnp.float32) + b2_ref[...]   # (2B, D)

    # --- pairwise Euclidean distance matrix (synthetic `frdist`) ------------
    f1 = f[:B]                                              # model(x) features
    f2 = f[B:]                                              # model(y) features
    sq = jnp.sum(f * f, axis=-1, keepdims=True)             # (2B, 1)
    cross = lax.dot_general(f1, f2, (((1,), (1,)), ((), ())),
                            preferred_element_type=jnp.float32)     # (B, B)
    d2 = jnp.maximum(sq[:B] + jnp.transpose(sq[B:]) - 2.0 * cross, 0.0)
    dist = jnp.sqrt(d2)

    # --- min/max normalization (exact divide, matches torch) ----------------
    # NOTE: dmax == dmin gives inf/NaN, exactly like the PyTorch reference.
    dmin = jnp.min(dist, keepdims=True)                     # (1, 1)
    dmax = jnp.max(dist, keepdims=True)                     # (1, 1)
    out_ref[...] = (dist - dmin) / (dmax - dmin)            # masked (B, B) store

    # torch.softmax(normalized, dim=0) is computed-and-discarded by the
    # reference forward; it has no observable effect, so it is elided.


# ----------------------------------------------------------------------------
# Module-equivalent wrapper (one pallas_call, whole problem in one block)
# ----------------------------------------------------------------------------
def frechet_distance_softmax_forward(x, y, params):
    w1, b1, w2, b2 = params
    B, C, H, W = x.shape
    F = w1.shape[1]
    D = w2.shape[1]
    HW = H * W

    # Stack x and y so the feature extractor runs once over 2B images.
    # Pure reshapes only: HW lands on the lane axis, no NCHW->NHWC transpose.
    xy = jnp.concatenate([x.reshape(B, C, HW), y.reshape(B, C, HW)], axis=0)

    # Tiny weight re-layouts (trace-time): F on sublanes for the VPU conv,
    # global-avg-pool's 1/HW folded into the projection weight.
    w1r = w1.reshape(C, F, 1)
    b1r = b1.reshape(F, 1)
    w2s = w2 * (1.0 / HW)

    out = pl.pallas_call(
        _fused_kernel,
        out_shape=jax.ShapeDtypeStruct((B, B), jnp.float32),
        in_specs=[
            pl.BlockSpec((2 * B, C, HW), lambda: (0, 0, 0)),
            pl.BlockSpec((C, F, 1), lambda: (0, 0, 0)),
            pl.BlockSpec((F, 1), lambda: (0, 0)),
            pl.BlockSpec((F, D), lambda: (0, 0)),
            pl.BlockSpec((1, D), lambda: (0, 0)),
        ],
        out_specs=pl.BlockSpec((B, B), lambda: (0, 0)),
    )(xy, w1r, b1r, w2s, b2)
    return out


def init_params(key, C, F, D):
    k1, k2, k3, k4 = jax.random.split(key, 4)
    w1 = jax.random.normal(k1, (C, F), jnp.float32) * 0.1
    b1 = jax.random.normal(k2, (1, F), jnp.float32) * 0.01
    w2 = jax.random.normal(k3, (F, D), jnp.float32) * 0.1
    b2 = jax.random.normal(k4, (1, D), jnp.float32) * 0.01
    return w1, b1, w2, b2


# Pure-JAX reference of the same forward (for a correctness check).
def _reference_forward(x, y, params):
    w1, b1, w2, b2 = params
    B, C, H, W = x.shape

    def feats(img):
        v = img.reshape(B, C, H * W)
        h = jnp.einsum('bcp,cf->bfp', v, w1) + b1.reshape(1, -1, 1)
        h = jnp.maximum(h, 0.0)
        pooled = jnp.mean(h, axis=-1)
        return pooled @ w2 + b2

    f1, f2 = feats(x), feats(y)
    d2 = (jnp.sum(f1 * f1, -1)[:, None] + jnp.sum(f2 * f2, -1)[None, :]
          - 2.0 * (f1 @ f2.T))
    dist = jnp.sqrt(jnp.maximum(d2, 0.0))
    return (dist - dist.min()) / (dist.max() - dist.min())


if __name__ == "__main__":
    B, C, H, W = 8, 4, 16, 16
    F, D = 32, 32

    key = jax.random.PRNGKey(0)
    kx, ky, kp = jax.random.split(key, 3)
    x = jax.random.normal(kx, (B, C, H, W), jnp.float32)
    y = jax.random.normal(ky, (B, C, H, W), jnp.float32)
    params = init_params(kp, C, F, D)

    fwd = jax.jit(frechet_distance_softmax_forward)
    out = jax.block_until_ready(fwd(x, y, params))

    ref = _reference_forward(x, y, params)

    assert out.shape == (B, B)
    assert bool(jnp.all(jnp.isfinite(out)))
    assert bool(jnp.allclose(out, ref, rtol=1e-3, atol=1e-3))
    print("KERNEL_OK")
</pallas_src>

<mosaic_0001>
module attributes {stable_mosaic.version = 11 : i64} {
  func.func @_fused_kernel(%arg0: memref<16x4x256xf32, #tpu.memory_space<vmem>>, %arg1: memref<4x32x1xf32, #tpu.memory_space<vmem>>, %arg2: memref<32x1xf32, #tpu.memory_space<vmem>>, %arg3: memref<32x32xf32, #tpu.memory_space<vmem>>, %arg4: memref<1x32xf32, #tpu.memory_space<vmem>>, %arg5: memref<8x8xf32, #tpu.memory_space<vmem>>) attributes {dimension_semantics = [], scalar_prefetch = 0 : i64, scratch_operands = 0 : i64, tpu.core_type = #tpu.core_type<tc>} {
    %c0 = arith.constant 0 : index
    %c0_0 = arith.constant 0 : index
    %c0_1 = arith.constant 0 : index
    %0 = vector.load %arg0[%c0, %c0_0, %c0_1] : memref<16x4x256xf32, #tpu.memory_space<vmem>>, vector<16x1x256xf32>
    %c0_2 = arith.constant 0 : index
    %c0_3 = arith.constant 0 : index
    %c0_4 = arith.constant 0 : index
    %1 = vector.load %arg1[%c0_2, %c0_3, %c0_4] : memref<4x32x1xf32, #tpu.memory_space<vmem>>, vector<1x32x1xf32>
    %2 = vector.shape_cast %1 : vector<1x32x1xf32> to vector<32x1xf32>
    %3 = vector.shape_cast %2 : vector<32x1xf32> to vector<1x32x1xf32>
    %4 = vector.broadcast %0 : vector<16x1x256xf32> to vector<16x32x256xf32>
    %5 = vector.broadcast %3 : vector<1x32x1xf32> to vector<16x32x256xf32>
    %6 = arith.mulf %4, %5 : vector<16x32x256xf32>
    %c0_5 = arith.constant 0 : index
    %c1 = arith.constant 1 : index
    %c0_6 = arith.constant 0 : index
    %7 = vector.load %arg0[%c0_5, %c1, %c0_6] : memref<16x4x256xf32, #tpu.memory_space<vmem>>, vector<16x1x256xf32>
    %c1_7 = arith.constant 1 : index
    %c0_8 = arith.constant 0 : index
    %c0_9 = arith.constant 0 : index
    %8 = vector.load %arg1[%c1_7, %c0_8, %c0_9] : memref<4x32x1xf32, #tpu.memory_space<vmem>>, vector<1x32x1xf32>
    %9 = vector.shape_cast %8 : vector<1x32x1xf32> to vector<32x1xf32>
    %10 = vector.shape_cast %9 : vector<32x1xf32> to vector<1x32x1xf32>
    %11 = vector.broadcast %7 : vector<16x1x256xf32> to vector<16x32x256xf32>
    %12 = vector.broadcast %10 : vector<1x32x1xf32> to vector<16x32x256xf32>
    %13 = arith.mulf %11, %12 : vector<16x32x256xf32>
    %14 = arith.addf %6, %13 : vector<16x32x256xf32>
    %c0_10 = arith.constant 0 : index
    %c2 = arith.constant 2 : index
    %c0_11 = arith.constant 0 : index
    %15 = vector.load %arg0[%c0_10, %c2, %c0_11] : memref<16x4x256xf32, #tpu.memory_space<vmem>>, vector<16x1x256xf32>
    %c2_12 = arith.constant 2 : index
    %c0_13 = arith.constant 0 : index
    %c0_14 = arith.constant 0 : index
    %16 = vector.load %arg1[%c2_12, %c0_13, %c0_14] : memref<4x32x1xf32, #tpu.memory_space<vmem>>, vector<1x32x1xf32>
    %17 = vector.shape_cast %16 : vector<1x32x1xf32> to vector<32x1xf32>
    %18 = vector.shape_cast %17 : vector<32x1xf32> to vector<1x32x1xf32>
    %19 = vector.broadcast %15 : vector<16x1x256xf32> to vector<16x32x256xf32>
    %20 = vector.broadcast %18 : vector<1x32x1xf32> to vector<16x32x256xf32>
    %21 = arith.mulf %19, %20 : vector<16x32x256xf32>
    %22 = arith.addf %14, %21 : vector<16x32x256xf32>
    %c0_15 = arith.constant 0 : index
    %c3 = arith.constant 3 : index
    %c0_16 = arith.constant 0 : index
    %23 = vector.load %arg0[%c0_15, %c3, %c0_16] : memref<16x4x256xf32, #tpu.memory_space<vmem>>, vector<16x1x256xf32>
    %c3_17 = arith.constant 3 : index
    %c0_18 = arith.constant 0 : index
    %c0_19 = arith.constant 0 : index
    %24 = vector.load %arg1[%c3_17, %c0_18, %c0_19] : memref<4x32x1xf32, #tpu.memory_space<vmem>>, vector<1x32x1xf32>
    %25 = vector.shape_cast %24 : vector<1x32x1xf32> to vector<32x1xf32>
    %26 = vector.shape_cast %25 : vector<32x1xf32> to vector<1x32x1xf32>
    %27 = vector.broadcast %23 : vector<16x1x256xf32> to vector<16x32x256xf32>
    %28 = vector.broadcast %26 : vector<1x32x1xf32> to vector<16x32x256xf32>
    %29 = arith.mulf %27, %28 : vector<16x32x256xf32>
    %30 = arith.addf %22, %29 : vector<16x32x256xf32>
    %c0_20 = arith.constant 0 : index
    %c0_21 = arith.constant 0 : index
    %31 = vector.load %arg2[%c0_20, %c0_21] : memref<32x1xf32, #tpu.memory_space<vmem>>, vector<32x1xf32>
    %32 = vector.shape_cast %31 : vector<32x1xf32> to vector<1x32x1xf32>
    %33 = vector.broadcast %32 : vector<1x32x1xf32> to vector<16x32x256xf32>
    %34 = arith.addf %30, %33 : vector<16x32x256xf32>
    %cst = arith.constant 0.000000e+00 : f32
    %35 = vector.broadcast %cst : f32 to vector<16x32x256xf32>
    %36 = arith.maximumf %34, %35 : vector<16x32x256xf32>
    %37 = vector.extract_strided_slice %36 {offsets = [0, 0, 0], sizes = [16, 32, 128], strides = [1, 1, 1]} : vector<16x32x256xf32> to vector<16x32x128xf32>
    %38 = vector.extract_strided_slice %36 {offsets = [0, 0, 128], sizes = [16, 32, 128], strides = [1, 1, 1]} : vector<16x32x256xf32> to vector<16x32x128xf32>
    %39 = arith.addf %37, %38 : vector<16x32x128xf32>
    %cst_22 = arith.constant dense<0.000000e+00> : vector<16x32xf32>
    %40 = vector.multi_reduction <add>, %39, %cst_22 [2] : vector<16x32x128xf32> to vector<16x32xf32>
    %c0_23 = arith.constant 0 : index
    %c0_24 = arith.constant 0 : index
    %41 = vector.load %arg3[%c0_23, %c0_24] : memref<32x32xf32, #tpu.memory_space<vmem>>, vector<32x32xf32>
    %cst_25 = arith.constant dense<0.000000e+00> : vector<16x32xf32>
    %42 = tpu.matmul %40, %41, %cst_25 {dimension_numbers = #tpu.dot_dimension_numbers<[1], [0], [0], [1], [0, 0, 1, 1], [], []>} : vector<16x32xf32>, vector<32x32xf32>, vector<16x32xf32> -> vector<16x32xf32>
    %c0_26 = arith.constant 0 : index
    %c0_27 = arith.constant 0 : index
    %43 = vector.load %arg4[%c0_26, %c0_27] : memref<1x32xf32, #tpu.memory_space<vmem>>, vector<1x32xf32>
    %44 = vector.broadcast %43 : vector<1x32xf32> to vector<16x32xf32>
    %45 = arith.addf %42, %44 : vector<16x32xf32>
    %46 = vector.extract_strided_slice %45 {offsets = [0, 0], sizes = [8, 32], strides = [1, 1]} : vector<16x32xf32> to vector<8x32xf32>
    %47 = vector.extract_strided_slice %45 {offsets = [8, 0], sizes = [8, 32], strides = [1, 1]} : vector<16x32xf32> to vector<8x32xf32>
    %48 = arith.mulf %45, %45 : vector<16x32xf32>
    %cst_28 = arith.constant dense<0.000000e+00> : vector<16xf32>
    %49 = vector.multi_reduction <add>, %48, %cst_28 [1] : vector<16x32xf32> to vector<16xf32>
    %50 = vector.shape_cast %49 : vector<16xf32> to vector<16x1xf32>
    %cst_29 = arith.constant dense<0.000000e+00> : vector<8x8xf32>
    %51 = tpu.matmul %46, %47, %cst_29 {dimension_numbers = #tpu.dot_dimension_numbers<[1], [1], [0], [0], [0, 0, 1, 0], [], []>} : vector<8x32xf32>, vector<8x32xf32>, vector<8x8xf32> -> vector<8x8xf32>
    %52 = vector.extract_strided_slice %50 {offsets = [0, 0], sizes = [8, 1], strides = [1, 1]} : vector<16x1xf32> to vector<8x1xf32>
    %53 = vector.extract_strided_slice %50 {offsets = [8, 0], sizes = [8, 1], strides = [1, 1]} : vector<16x1xf32> to vector<8x1xf32>
    %54 = tpu.transpose %53, [1, 0] : vector<8x1xf32> -> vector<1x8xf32>
    %55 = vector.broadcast %52 : vector<8x1xf32> to vector<8x8xf32>
    %56 = vector.broadcast %54 : vector<1x8xf32> to vector<8x8xf32>
    %57 = arith.addf %55, %56 : vector<8x8xf32>
    %cst_30 = arith.constant 2.000000e+00 : f32
    %58 = vector.broadcast %cst_30 : f32 to vector<8x8xf32>
    %59 = arith.mulf %58, %51 : vector<8x8xf32>
    %60 = arith.subf %57, %59 : vector<8x8xf32>
    %cst_31 = arith.constant 0.000000e+00 : f32
    %61 = vector.broadcast %cst_31 : f32 to vector<8x8xf32>
    %62 = arith.maximumf %60, %61 : vector<8x8xf32>
    %63 = math.sqrt %62 : vector<8x8xf32>
    %64 = vector.shape_cast %63 : vector<8x8xf32> to vector<1x8x8xf32>
    %cst_32 = arith.constant dense<0x7F800000> : vector<1xf32>
    %65 = vector.multi_reduction <minimumf>, %64, %cst_32 [1, 2] : vector<1x8x8xf32> to vector<1xf32>
    %66 = vector.shape_cast %65 : vector<1xf32> to vector<1x1x1xf32>
    %67 = vector.extract %66[0, 0, 0] : f32 from vector<1x1x1xf32>
    %68 = vector.broadcast %67 : f32 to vector<1x1xf32>
    %69 = vector.shape_cast %63 : vector<8x8xf32> to vector<1x8x8xf32>
    %cst_33 = arith.constant dense<0xFF800000> : vector<1xf32>
    %70 = vector.multi_reduction <maximumf>, %69, %cst_33 [1, 2] : vector<1x8x8xf32> to vector<1xf32>
    %71 = vector.shape_cast %70 : vector<1xf32> to vector<1x1x1xf32>
    %72 = vector.extract %71[0, 0, 0] : f32 from vector<1x1x1xf32>
    %73 = vector.broadcast %72 : f32 to vector<1x1xf32>
    %74 = vector.broadcast %68 : vector<1x1xf32> to vector<8x8xf32>
    %75 = arith.subf %63, %74 : vector<8x8xf32>
    %76 = arith.subf %73, %68 : vector<1x1xf32>
    %77 = vector.broadcast %76 : vector<1x1xf32> to vector<8x8xf32>
    %78 = arith.divf %75, %77 : vector<8x8xf32>
    %c0_34 = arith.constant 0 : index
    %c0_35 = arith.constant 0 : index
    %79 = vector.load %arg5[%c0_34, %c0_35] : memref<8x8xf32, #tpu.memory_space<vmem>>, vector<8x8xf32>
    tpu.vector_store %arg5[%c0_34, %c0_35], %78 {strides = array<i32>} : memref<8x8xf32, #tpu.memory_space<vmem>>, vector<8x8xf32>,
    return
  }
}

</mosaic_0001>

<llo_original>
// kernel: frechet_distance_softmax_forward.1
$region0: #{frechet_distance_softmax_forward.1}
  #allocation0 [shape = 'u32[]', space=smem, size = 0x4, offset = 0x4, fixed_abs, tag = 'smem constant byte address 0x4 - core index']
  #allocation1 [shape = 'u32[144,128]{1,0:T(1,128)}', space=vmem, size = 0x12000, scoped, tag = 'internal scratch']
  %s0 = inlined_call_operand.vmem [shape: f32[16,4,256], index: 0, kind: input, shape index: {}]
  %s1 = inlined_call_operand.vmem [shape: f32[4,32,1], index: 1, kind: input, shape index: {}]
  %s2 = inlined_call_operand.vmem [shape: f32[32,1], index: 2, kind: input, shape index: {}]
  %s3 = inlined_call_operand.vmem [shape: f32[32,32], index: 3, kind: input, shape index: {}]
  %s4 = inlined_call_operand.vmem [shape: f32[1,32], index: 4, kind: input, shape index: {}]
  %s5 = inlined_call_operand.hbm [shape: f32[8,8], index: 5, kind: output, shape index: {}]
  %s6 = sld [smem:[#allocation0]]
  $region30: #{frechet_distance_softmax_forward.1} parent=0
    _
  %s8 = ssub.s32 1, %s6
  %s9 = scalar_select 0, %s8, %s6
  $region1: #{frechet_distance_softmax_forward.1} parent=0
    #allocation2 [shape = 'u8[4096]{0}', space=vmem, size = 0x1000, scoped, tag = 'output window, operand 0, single buffered']
    #allocation3 [shape = 's32[1]{0}', space=sflag, size = 0x4, scoped, tag = 'scoped memory for frechet_distance_softmax_forward.1']
    %10 = vsyncpa [#allocation3], 0
    // Predicated region
    $region2: #{frechet_distance_softmax_forward.1} parent=1 // pred_check
      _
    $region3: #{frechet_distance_softmax_forward.1} parent=1 // pred_check_branch
      %12 = sbr.rel (0) target = $region5
    $region4: #{frechet_distance_softmax_forward.1} parent=1 // pred_region
      _
    $region5: #{frechet_distance_softmax_forward.1} parent=1 // pred_fallthru
      _
    // Predicated region
    $region6: #{frechet_distance_softmax_forward.1} parent=1 // pred_check
      _
    $region7: #{frechet_distance_softmax_forward.1} parent=1 // pred_check_branch
      %14 = sbr.rel (0) target = $region9
    $region8: #{frechet_distance_softmax_forward.1} parent=1 // pred_region
      _
    $region9: #{frechet_distance_softmax_forward.1} parent=1 // pred_fallthru
      _
    // Predicated region
    $region10: #{frechet_distance_softmax_forward.1} parent=1 // pred_check
      _
    $region11: #{frechet_distance_softmax_forward.1} parent=1 // pred_check_branch
      %16 = sbr.rel (0) target = $region13
    $region12: #{frechet_distance_softmax_forward.1} parent=1 // pred_region
      _
    $region13: #{frechet_distance_softmax_forward.1} parent=1 // pred_fallthru
      _
    // Predicated region
    $region14: #{frechet_distance_softmax_forward.1} parent=1 // pred_check
      _
    $region15: #{frechet_distance_softmax_forward.1} parent=1 // pred_check_branch
      %18 = sbr.rel (0) target = $region17
    $region16: #{frechet_distance_softmax_forward.1} parent=1 // pred_region
      _
    $region17: #{frechet_distance_softmax_forward.1} parent=1 // pred_fallthru
      _
    // Predicated region
    $region18: #{frechet_distance_softmax_forward.1} parent=1 // pred_check
      _
    $region19: #{frechet_distance_softmax_forward.1} parent=1 // pred_check_branch
      %20 = sbr.rel (0) target = $region21
    $region20: #{frechet_distance_softmax_forward.1} parent=1 // pred_region
      _
    $region21: #{frechet_distance_softmax_forward.1} parent=1 // pred_fallthru
      _
    %v21 = vld [vmem:[%s0] ss:$4 sm:$0x3]
    %s22 = scalar_lea.vmem %s0, 8
    %v23 = vld [vmem:[%s22] ss:$4 sm:$0x3]
    %s24 = scalar_lea.vmem %s0, 16
    %v25 = vld [vmem:[%s24] ss:$4 sm:$0x3]
    %s26 = scalar_lea.vmem %s0, 24
    %v27 = vld [vmem:[%s26] ss:$4 sm:$0x3]
    %s28 = scalar_lea.vmem %s0, 32
    %v29 = vld [vmem:[%s28] ss:$4 sm:$0x3]
    %s30 = scalar_lea.vmem %s0, 40
    %v31 = vld [vmem:[%s30] ss:$4 sm:$0x3]
    %s32 = scalar_lea.vmem %s0, 48
    %v33 = vld [vmem:[%s32] ss:$4 sm:$0x3]
    %s34 = scalar_lea.vmem %s0, 56
    %v35 = vld [vmem:[%s34] ss:$4 sm:$0x3]
    %s36 = scalar_lea.vmem %s0, 64
    %v37 = vld [vmem:[%s36] ss:$4 sm:$0x3]
    %s38 = scalar_lea.vmem %s0, 72
    %v39 = vld [vmem:[%s38] ss:$4 sm:$0x3]
    %s40 = scalar_lea.vmem %s0, 80
    %v41 = vld [vmem:[%s40] ss:$4 sm:$0x3]
    %s42 = scalar_lea.vmem %s0, 88
    %v43 = vld [vmem:[%s42] ss:$4 sm:$0x3]
    %s44 = scalar_lea.vmem %s0, 96
    %v45 = vld [vmem:[%s44] ss:$4 sm:$0x3]
    %s46 = scalar_lea.vmem %s0, 104
    %v47 = vld [vmem:[%s46] ss:$4 sm:$0x3]
    %s48 = scalar_lea.vmem %s0, 112
    %v49 = vld [vmem:[%s48] ss:$4 sm:$0x3]
    %s50 = scalar_lea.vmem %s0, 120
    %v51 = vld [vmem:[%s50] ss:$4 sm:$0x3]
    %v52 = vld [vmem:[%s1] sm:$0xff]
    %v53 = vld [vmem:[%s1 + $0x8] sm:$0xff]
    %v54 = vld [vmem:[%s1 + $0x10] sm:$0xff]
    %v55 = vld [vmem:[%s1 + $0x18] sm:$0xff]
    %v72 = vlaneseq
    %v73 = vshrl.u32 %v72, 7
    %v74 = vsub.s32 0, %v73
    %v75 = vrot.slane %v21, %v74
    %v76 = vlaneseq
    %v77 = vshrl.u32 %v76, 7
    %v78 = vsub.s32 1, %v77
    %v79 = vrot.slane %v21, %v78
    %v80 = vlaneseq
    %v81 = vshrl.u32 %v80, 7
    %v82 = vsub.s32 0, %v81
    %v83 = vrot.slane %v23, %v82
    %v84 = vlaneseq
    %v85 = vshrl.u32 %v84, 7
    %v86 = vsub.s32 1, %v85
    %v87 = vrot.slane %v23, %v86
    %v88 = vlaneseq
    %v89 = vshrl.u32 %v88, 7
    %v90 = vsub.s32 0, %v89
    %v91 = vrot.slane %v25, %v90
    %v92 = vlaneseq
    %v93 = vshrl.u32 %v92, 7
    %v94 = vsub.s32 1, %v93
    %v95 = vrot.slane %v25, %v94
    %v96 = vlaneseq
    %v97 = vshrl.u32 %v96, 7
    %v98 = vsub.s32 0, %v97
    %v99 = vrot.slane %v27, %v98
    %v100 = vlaneseq
    %v101 = vshrl.u32 %v100, 7
    %v102 = vsub.s32 1, %v101
    %v103 = vrot.slane %v27, %v102
    %v104 = vlaneseq
    %v105 = vshrl.u32 %v104, 7
    %v106 = vsub.s32 0, %v105
    %v107 = vrot.slane %v29, %v106
    %v108 = vlaneseq
    %v109 = vshrl.u32 %v108, 7
    %v110 = vsub.s32 1, %v109
    %v111 = vrot.slane %v29, %v110
    %v112 = vlaneseq
    %v113 = vshrl.u32 %v112, 7
    %v114 = vsub.s32 0, %v113
    %v115 = vrot.slane %v31, %v114
    %v116 = vlaneseq
    %v117 = vshrl.u32 %v116, 7
    %v118 = vsub.s32 1, %v117
    %v119 = vrot.slane %v31, %v118
    %v120 = vlaneseq
    %v121 = vshrl.u32 %v120, 7
    %v122 = vsub.s32 0, %v121
    %v123 = vrot.slane %v33, %v122
    %v124 = vlaneseq
    %v125 = vshrl.u32 %v124, 7
    %v126 = vsub.s32 1, %v125
    %v127 = vrot.slane %v33, %v126
    %v128 = vlaneseq
    %v129 = vshrl.u32 %v128, 7
    %v130 = vsub.s32 0, %v129
    %v131 = vrot.slane %v35, %v130
    %v132 = vlaneseq
    %v133 = vshrl.u32 %v132, 7
    %v134 = vsub.s32 1, %v133
    %v135 = vrot.slane %v35, %v134
    %v136 = vlaneseq
    %v137 = vshrl.u32 %v136, 7
    %v138 = vsub.s32 0, %v137
    %v139 = vrot.slane %v37, %v138
    %v140 = vlaneseq
    %v141 = vshrl.u32 %v140, 7
    %v142 = vsub.s32 1, %v141
    %v143 = vrot.slane %v37, %v142
    %v144 = vlaneseq
    %v145 = vshrl.u32 %v144, 7
    %v146 = vsub.s32 0, %v145
    %v147 = vrot.slane %v39, %v146
    %v148 = vlaneseq
    %v149 = vshrl.u32 %v148, 7
    %v150 = vsub.s32 1, %v149
    %v151 = vrot.slane %v39, %v150
    %v152 = vlaneseq
    %v153 = vshrl.u32 %v152, 7
    %v154 = vsub.s32 0, %v153
    %v155 = vrot.slane %v41, %v154
    %v156 = vlaneseq
    %v157 = vshrl.u32 %v156, 7
    %v158 = vsub.s32 1, %v157
    %v159 = vrot.slane %v41, %v158
    %v160 = vlaneseq
    %v161 = vshrl.u32 %v160, 7
    %v162 = vsub.s32 0, %v161
    %v163 = vrot.slane %v43, %v162
    %v164 = vlaneseq
    %v165 = vshrl.u32 %v164, 7
    %v166 = vsub.s32 1, %v165
    %v167 = vrot.slane %v43, %v166
    %v168 = vlaneseq
    %v169 = vshrl.u32 %v168, 7
    %v170 = vsub.s32 0, %v169
    %v171 = vrot.slane %v45, %v170
    %v172 = vlaneseq
    %v173 = vshrl.u32 %v172, 7
    %v174 = vsub.s32 1, %v173
    %v175 = vrot.slane %v45, %v174
    %v176 = vlaneseq
    %v177 = vshrl.u32 %v176, 7
    %v178 = vsub.s32 0, %v177
    %v179 = vrot.slane %v47, %v178
    %v180 = vlaneseq
    %v181 = vshrl.u32 %v180, 7
    %v182 = vsub.s32 1, %v181
    %v183 = vrot.slane %v47, %v182
    %v184 = vlaneseq
    %v185 = vshrl.u32 %v184, 7
    %v186 = vsub.s32 0, %v185
    %v187 = vrot.slane %v49, %v186
    %v188 = vlaneseq
    %v189 = vshrl.u32 %v188, 7
    %v190 = vsub.s32 1, %v189
    %v191 = vrot.slane %v49, %v190
    %v192 = vlaneseq
    %v193 = vshrl.u32 %v192, 7
    %v194 = vsub.s32 0, %v193
    %v195 = vrot.slane %v51, %v194
    %v196 = vlaneseq
    %v197 = vshrl.u32 %v196, 7
    %v198 = vsub.s32 1, %v197
    %v199 = vrot.slane %v51, %v198
    %233 = vset.pattern.permute.xlu0 0
    %234 = vperm.xlu0 %233, %v52
    %v235 = vpop.permute.xlu0 %234
    %238 = vset.pattern.permute.xlu0 0
    %239 = vperm.xlu0 %238, %v53
    %v240 = vpop.permute.xlu0 %239
    %243 = vset.pattern.permute.xlu0 0
    %244 = vperm.xlu0 %243, %v54
    %v245 = vpop.permute.xlu0 %244
    %248 = vset.pattern.permute.xlu0 0
    %249 = vperm.xlu0 %248, %v55
    %v250 = vpop.permute.xlu0 %249
    %v252 = vmul.f32 %v75, %v235
    %v253 = vmul.f32 %v79, %v235
    %v254 = vmul.f32 %v75, %v240
    %v255 = vmul.f32 %v79, %v240
    %v256 = vmul.f32 %v75, %v245
    %v257 = vmul.f32 %v79, %v245
    %v258 = vmul.f32 %v75, %v250
    %v259 = vmul.f32 %v79, %v250
    %v260 = vmul.f32 %v83, %v235
    %v261 = vmul.f32 %v87, %v235
    %v262 = vmul.f32 %v83, %v240
    %v263 = vmul.f32 %v87, %v240
    %v264 = vmul.f32 %v83, %v245
    %v265 = vmul.f32 %v87, %v245
    %v266 = vmul.f32 %v83, %v250
    %v267 = vmul.f32 %v87, %v250
    %v268 = vmul.f32 %v91, %v235
    %v269 = vmul.f32 %v95, %v235
    %v270 = vmul.f32 %v91, %v240
    %v271 = vmul.f32 %v95, %v240
    %v272 = vmul.f32 %v91, %v245
    %v273 = vmul.f32 %v95, %v245
    %v274 = vmul.f32 %v91, %v250
    %v275 = vmul.f32 %v95, %v250
    %v276 = vmul.f32 %v99, %v235
    %v277 = vmul.f32 %v103, %v235
    %v278 = vmul.f32 %v99, %v240
    %v279 = vmul.f32 %v103, %v240
    %v280 = vmul.f32 %v99, %v245
    %v281 = vmul.f32 %v103, %v245
    %v282 = vmul.f32 %v99, %v250
    %v283 = vmul.f32 %v103, %v250
    %v284 = vmul.f32 %v107, %v235
    %v285 = vmul.f32 %v111, %v235
    %v286 = vmul.f32 %v107, %v240
    %v287 = vmul.f32 %v111, %v240
    %v288 = vmul.f32 %v107, %v245
    %v289 = vmul.f32 %v111, %v245
    %v290 = vmul.f32 %v107, %v250
    %v291 = vmul.f32 %v111, %v250
    %v292 = vmul.f32 %v115, %v235
    %v293 = vmul.f32 %v119, %v235
    %v294 = vmul.f32 %v115, %v240
    %v295 = vmul.f32 %v119, %v240
    %v296 = vmul.f32 %v115, %v245
    %v297 = vmul.f32 %v119, %v245
    %v298 = vmul.f32 %v115, %v250
    %v299 = vmul.f32 %v119, %v250
    %v300 = vmul.f32 %v123, %v235
    %v301 = vmul.f32 %v127, %v235
    %v302 = vmul.f32 %v123, %v240
    %v303 = vmul.f32 %v127, %v240
    %v304 = vmul.f32 %v123, %v245
    %v305 = vmul.f32 %v127, %v245
    %v306 = vmul.f32 %v123, %v250
    %v307 = vmul.f32 %v127, %v250
    %v308 = vmul.f32 %v131, %v235
    %v309 = vmul.f32 %v135, %v235
    %v310 = vmul.f32 %v131, %v240
    %v311 = vmul.f32 %v135, %v240
    %v312 = vmul.f32 %v131, %v245
    %v313 = vmul.f32 %v135, %v245
    %v314 = vmul.f32 %v131, %v250
    %v315 = vmul.f32 %v135, %v250
    %v316 = vmul.f32 %v139, %v235
    %v317 = vmul.f32 %v143, %v235
    %v318 = vmul.f32 %v139, %v240
    %v319 = vmul.f32 %v143, %v240
    %v320 = vmul.f32 %v139, %v245
    %v321 = vmul.f32 %v143, %v245
    %v322 = vmul.f32 %v139, %v250
    %v323 = vmul.f32 %v143, %v250
    %v324 = vmul.f32 %v147, %v235
    %v325 = vmul.f32 %v151, %v235
    %v326 = vmul.f32 %v147, %v240
    %v327 = vmul.f32 %v151, %v240
    %v328 = vmul.f32 %v147, %v245
    %v329 = vmul.f32 %v151, %v245
    %v330 = vmul.f32 %v147, %v250
    %v331 = vmul.f32 %v151, %v250
    %v332 = vmul.f32 %v155, %v235
    %v333 = vmul.f32 %v159, %v235
    %v334 = vmul.f32 %v155, %v240
    %v335 = vmul.f32 %v159, %v240
    %v336 = vmul.f32 %v155, %v245
    %v337 = vmul.f32 %v159, %v245
    %v338 = vmul.f32 %v155, %v250
    %v339 = vmul.f32 %v159, %v250
    %v340 = vmul.f32 %v163, %v235
    %v341 = vmul.f32 %v167, %v235
    %v342 = vmul.f32 %v163, %v240
    %v343 = vmul.f32 %v167, %v240
    %v344 = vmul.f32 %v163, %v245
    %v345 = vmul.f32 %v167, %v245
    %v346 = vmul.f32 %v163, %v250
    %v347 = vmul.f32 %v167, %v250
    %v348 = vmul.f32 %v171, %v235
    %v349 = vmul.f32 %v175, %v235
    %v350 = vmul.f32 %v171, %v240
    %v351 = vmul.f32 %v175, %v240
    %v352 = vmul.f32 %v171, %v245
    %v353 = vmul.f32 %v175, %v245
    %v354 = vmul.f32 %v171, %v250
    %v355 = vmul.f32 %v175, %v250
    %v356 = vmul.f32 %v179, %v235
    %v357 = vmul.f32 %v183, %v235
    %v358 = vmul.f32 %v179, %v240
    %v359 = vmul.f32 %v183, %v240
    %v360 = vmul.f32 %v179, %v245
    %v361 = vmul.f32 %v183, %v245
    %v362 = vmul.f32 %v179, %v250
    %v363 = vmul.f32 %v183, %v250
    %v364 = vmul.f32 %v187, %v235
    %v365 = vmul.f32 %v191, %v235
    %v366 = vmul.f32 %v187, %v240
    %v367 = vmul.f32 %v191, %v240
    %v368 = vmul.f32 %v187, %v245
    %v369 = vmul.f32 %v191, %v245
    %v370 = vmul.f32 %v187, %v250
    %v371 = vmul.f32 %v191, %v250
    %v372 = vmul.f32 %v195, %v235
    %v373 = vmul.f32 %v199, %v235
    %v374 = vmul.f32 %v195, %v240
    %v375 = vmul.f32 %v199, %v240
    %v376 = vmul.f32 %v195, %v245
    %v377 = vmul.f32 %v199, %v245
    %v378 = vmul.f32 %v195, %v250
    %v379 = vmul.f32 %v199, %v250
    %s380 = scalar_lea.vmem %s0, 1
    %v381 = vld [vmem:[%s380] ss:$4 sm:$0x3]
    %s382 = scalar_lea.vmem %s0, 9
    %v383 = vld [vmem:[%s382] ss:$4 sm:$0x3]
    %s384 = scalar_lea.vmem %s0, 17
    %v385 = vld [vmem:[%s384] ss:$4 sm:$0x3]
    %s386 = scalar_lea.vmem %s0, 25
    %v387 = vld [vmem:[%s386] ss:$4 sm:$0x3]
    %s388 = scalar_lea.vmem %s0, 33
    %v389 = vld [vmem:[%s388] ss:$4 sm:$0x3]
    %s390 = scalar_lea.vmem %s0, 41
    %v391 = vld [vmem:[%s390] ss:$4 sm:$0x3]
    %s392 = scalar_lea.vmem %s0, 49
    %v393 = vld [vmem:[%s392] ss:$4 sm:$0x3]
    %s394 = scalar_lea.vmem %s0, 57
    %v395 = vld [vmem:[%s394] ss:$4 sm:$0x3]
    %s396 = scalar_lea.vmem %s0, 65
    %v397 = vld [vmem:[%s396] ss:$4 sm:$0x3]
    %s398 = scalar_lea.vmem %s0, 73
    %v399 = vld [vmem:[%s398] ss:$4 sm:$0x3]
    %s400 = scalar_lea.vmem %s0, 81
    %v401 = vld [vmem:[%s400] ss:$4 sm:$0x3]
    %s402 = scalar_lea.vmem %s0, 89
    %v403 = vld [vmem:[%s402] ss:$4 sm:$0x3]
    %s404 = scalar_lea.vmem %s0, 97
    %v405 = vld [vmem:[%s404] ss:$4 sm:$0x3]
    %s406 = scalar_lea.vmem %s0, 105
    %v407 = vld [vmem:[%s406] ss:$4 sm:$0x3]
    %s408 = scalar_lea.vmem %s0, 113
    %v409 = vld [vmem:[%s408] ss:$4 sm:$0x3]
    %s410 = scalar_lea.vmem %s0, 121
    %v411 = vld [vmem:[%s410] ss:$4 sm:$0x3]
    %s412 = scalar_lea.vmem %s1, 32
    %v413 = vld [vmem:[%s412] sm:$0xff]
    %v414 = vld [vmem:[%s412 + $0x8] sm:$0xff]
    %v415 = vld [vmem:[%s412 + $0x10] sm:$0xff]
    %v416 = vld [vmem:[%s412 + $0x18] sm:$0xff]
    %v433 = vlaneseq
    %v434 = vshrl.u32 %v433, 7
    %v435 = vsub.s32 0, %v434
    %v436 = vrot.slane %v381, %v435
    %v437 = vlaneseq
    %v438 = vshrl.u32 %v437, 7
    %v439 = vsub.s32 1, %v438
    %v440 = vrot.slane %v381, %v439
    %v441 = vlaneseq
    %v442 = vshrl.u32 %v441, 7
    %v443 = vsub.s32 0, %v442
    %v444 = vrot.slane %v383, %v443
    %v445 = vlaneseq
    %v446 = vshrl.u32 %v445, 7
    %v447 = vsub.s32 1, %v446
    %v448 = vrot.slane %v383, %v447
    %v449 = vlaneseq
    %v450 = vshrl.u32 %v449, 7
    %v451 = vsub.s32 0, %v450
    %v452 = vrot.slane %v385, %v451
    %v453 = vlaneseq
    %v454 = vshrl.u32 %v453, 7
    %v455 = vsub.s32 1, %v454
    %v456 = vrot.slane %v385, %v455
    %v457 = vlaneseq
    %v458 = vshrl.u32 %v457, 7
    %v459 = vsub.s32 0, %v458
    %v460 = vrot.slane %v387, %v459
    %v461 = vlaneseq
    %v462 = vshrl.u32 %v461, 7
    %v463 = vsub.s32 1, %v462
    %v464 = vrot.slane %v387, %v463
    %v465 = vlaneseq
    %v466 = vshrl.u32 %v465, 7
    %v467 = vsub.s32 0, %v466
    %v468 = vrot.slane %v389, %v467
    %v469 = vlaneseq
    %v470 = vshrl.u32 %v469, 7
    %v471 = vsub.s32 1, %v470
    %v472 = vrot.slane %v389, %v471
    %v473 = vlaneseq
    %v474 = vshrl.u32 %v473, 7
    %v475 = vsub.s32 0, %v474
    %v476 = vrot.slane %v391, %v475
    %v477 = vlaneseq
    %v478 = vshrl.u32 %v477, 7
    %v479 = vsub.s32 1, %v478
    %v480 = vrot.slane %v391, %v479
    %v481 = vlaneseq
    %v482 = vshrl.u32 %v481, 7
    %v483 = vsub.s32 0, %v482
    %v484 = vrot.slane %v393, %v483
    %v485 = vlaneseq
    %v486 = vshrl.u32 %v485, 7
    %v487 = vsub.s32 1, %v486
    %v488 = vrot.slane %v393, %v487
    %v489 = vlaneseq
    %v490 = vshrl.u32 %v489, 7
    %v491 = vsub.s32 0, %v490
    %v492 = vrot.slane %v395, %v491
    %v493 = vlaneseq
    %v494 = vshrl.u32 %v493, 7
    %v495 = vsub.s32 1, %v494
    %v496 = vrot.slane %v395, %v495
    %v497 = vlaneseq
    %v498 = vshrl.u32 %v497, 7
    %v499 = vsub.s32 0, %v498
    %v500 = vrot.slane %v397, %v499
    %v501 = vlaneseq
    %v502 = vshrl.u32 %v501, 7
    %v503 = vsub.s32 1, %v502
    %v504 = vrot.slane %v397, %v503
    %v505 = vlaneseq
    %v506 = vshrl.u32 %v505, 7
    %v507 = vsub.s32 0, %v506
    %v508 = vrot.slane %v399, %v507
    %v509 = vlaneseq
    %v510 = vshrl.u32 %v509, 7
    %v511 = vsub.s32 1, %v510
    %v512 = vrot.slane %v399, %v511
    %v513 = vlaneseq
    %v514 = vshrl.u32 %v513, 7
    %v515 = vsub.s32 0, %v514
    %v516 = vrot.slane %v401, %v515
    %v517 = vlaneseq
    %v518 = vshrl.u32 %v517, 7
    %v519 = vsub.s32 1, %v518
    %v520 = vrot.slane %v401, %v519
    %v521 = vlaneseq
    %v522 = vshrl.u32 %v521, 7
    %v523 = vsub.s32 0, %v522
    %v524 = vrot.slane %v403, %v523
    %v525 = vlaneseq
    %v526 = vshrl.u32 %v525, 7
    %v527 = vsub.s32 1, %v526
    %v528 = vrot.slane %v403, %v527
    %v529 = vlaneseq
    %v530 = vshrl.u32 %v529, 7
    %v531 = vsub.s32 0, %v530
    %v532 = vrot.slane %v405, %v531
    %v533 = vlaneseq
    %v534 = vshrl.u32 %v533, 7
    %v535 = vsub.s32 1, %v534
    %v536 = vrot.slane %v405, %v535
    %v537 = vlaneseq
    %v538 = vshrl.u32 %v537, 7
    %v539 = vsub.s32 0, %v538
    %v540 = vrot.slane %v407, %v539
    %v541 = vlaneseq
    %v542 = vshrl.u32 %v541, 7
    %v543 = vsub.s32 1, %v542
    %v544 = vrot.slane %v407, %v543
    %v545 = vlaneseq
    %v546 = vshrl.u32 %v545, 7
    %v547 = vsub.s32 0, %v546
    %v548 = vrot.slane %v409, %v547
    %v549 = vlaneseq
    %v550 = vshrl.u32 %v549, 7
    %v551 = vsub.s32 1, %v550
    %v552 = vrot.slane %v409, %v551
    %v553 = vlaneseq
    %v554 = vshrl.u32 %v553, 7
    %v555 = vsub.s32 0, %v554
    %v556 = vrot.slane %v411, %v555
    %v557 = vlaneseq
    %v558 = vshrl.u32 %v557, 7
    %v559 = vsub.s32 1, %v558
    %v560 = vrot.slane %v411, %v559
    %594 = vset.pattern.permute.xlu0 0
    %595 = vperm.xlu0 %594, %v413
    %v596 = vpop.permute.xlu0 %595
    %599 = vset.pattern.permute.xlu0 0
    %600 = vperm.xlu0 %599, %v414
    %v601 = vpop.permute.xlu0 %600
    %604 = vset.pattern.permute.xlu0 0
    %605 = vperm.xlu0 %604, %v415
    %v606 = vpop.permute.xlu0 %605
    %609 = vset.pattern.permute.xlu0 0
    %610 = vperm.xlu0 %609, %v416
    %v611 = vpop.permute.xlu0 %610
    %v613 = vmul.f32 %v436, %v596
    %v614 = vmul.f32 %v440, %v596
    %v615 = vmul.f32 %v436, %v601
    %v616 = vmul.f32 %v440, %v601
    %v617 = vmul.f32 %v436, %v606
    %v618 = vmul.f32 %v440, %v606
    %v619 = vmul.f32 %v436, %v611
    %v620 = vmul.f32 %v440, %v611
    %v621 = vmul.f32 %v444, %v596
    %v622 = vmul.f32 %v448, %v596
    %v623 = vmul.f32 %v444, %v601
    %v624 = vmul.f32 %v448, %v601
    %v625 = vmul.f32 %v444, %v606
    %v626 = vmul.f32 %v448, %v606
    %v627 = vmul.f32 %v444, %v611
    %v628 = vmul.f32 %v448, %v611
    %v629 = vmul.f32 %v452, %v596
    %v630 = vmul.f32 %v456, %v596
    %v631 = vmul.f32 %v452, %v601
    %v632 = vmul.f32 %v456, %v601
    %v633 = vmul.f32 %v452, %v606
    %v634 = vmul.f32 %v456, %v606
    %v635 = vmul.f32 %v452, %v611
    %v636 = vmul.f32 %v456, %v611
    %v637 = vmul.f32 %v460, %v596
    %v638 = vmul.f32 %v464, %v596
    %v639 = vmul.f32 %v460, %v601
    %v640 = vmul.f32 %v464, %v601
    %v641 = vmul.f32 %v460, %v606
    %v642 = vmul.f32 %v464, %v606
    %v643 = vmul.f32 %v460, %v611
    %v644 = vmul.f32 %v464, %v611
    %v645 = vmul.f32 %v468, %v596
    %v646 = vmul.f32 %v472, %v596
    %v647 = vmul.f32 %v468, %v601
    %v648 = vmul.f32 %v472, %v601
    %v649 = vmul.f32 %v468, %v606
    %v650 = vmul.f32 %v472, %v606
    %v651 = vmul.f32 %v468, %v611
    %v652 = vmul.f32 %v472, %v611
    %v653 = vmul.f32 %v476, %v596
    %v654 = vmul.f32 %v480, %v596
    %v655 = vmul.f32 %v476, %v601
    %v656 = vmul.f32 %v480, %v601
    %v657 = vmul.f32 %v476, %v606
    %v658 = vmul.f32 %v480, %v606
    %v659 = vmul.f32 %v476, %v611
    %v660 = vmul.f32 %v480, %v611
    %v661 = vmul.f32 %v484, %v596
    %v662 = vmul.f32 %v488, %v596
    %v663 = vmul.f32 %v484, %v601
    %v664 = vmul.f32 %v488, %v601
    %v665 = vmul.f32 %v484, %v606
    %v666 = vmul.f32 %v488, %v606
    %v667 = vmul.f32 %v484, %v611
    %v668 = vmul.f32 %v488, %v611
    %v669 = vmul.f32 %v492, %v596
    %v670 = vmul.f32 %v496, %v596
    %v671 = vmul.f32 %v492, %v601
    %v672 = vmul.f32 %v496, %v601
    %v673 = vmul.f32 %v492, %v606
    %v674 = vmul.f32 %v496, %v606
    %v675 = vmul.f32 %v492, %v611
    %v676 = vmul.f32 %v496, %v611
    %v677 = vmul.f32 %v500, %v596
    %v678 = vmul.f32 %v504, %v596
    %v679 = vmul.f32 %v500, %v601
    %v680 = vmul.f32 %v504, %v601
    %v681 = vmul.f32 %v500, %v606
    %v682 = vmul.f32 %v504, %v606
    %v683 = vmul.f32 %v500, %v611
    %v684 = vmul.f32 %v504, %v611
    %v685 = vmul.f32 %v508, %v596
    %v686 = vmul.f32 %v512, %v596
    %v687 = vmul.f32 %v508, %v601
    %v688 = vmul.f32 %v512, %v601
    %v689 = vmul.f32 %v508, %v606
    %v690 = vmul.f32 %v512, %v606
    %v691 = vmul.f32 %v508, %v611
    %v692 = vmul.f32 %v512, %v611
    %v693 = vmul.f32 %v516, %v596
    %v694 = vmul.f32 %v520, %v596
    %v695 = vmul.f32 %v516, %v601
    %v696 = vmul.f32 %v520, %v601
    %v697 = vmul.f32 %v516, %v606
    %v698 = vmul.f32 %v520, %v606
    %v699 = vmul.f32 %v516, %v611
    %v700 = vmul.f32 %v520, %v611
    %v701 = vmul.f32 %v524, %v596
    %v702 = vmul.f32 %v528, %v596
    %v703 = vmul.f32 %v524, %v601
    %v704 = vmul.f32 %v528, %v601
    %v705 = vmul.f32 %v524, %v606
    %v706 = vmul.f32 %v528, %v606
    %v707 = vmul.f32 %v524, %v611
    %v708 = vmul.f32 %v528, %v611
    %v709 = vmul.f32 %v532, %v596
    %v710 = vmul.f32 %v536, %v596
    %v711 = vmul.f32 %v532, %v601
    %v712 = vmul.f32 %v536, %v601
    %v713 = vmul.f32 %v532, %v606
    %v714 = vmul.f32 %v536, %v606
    %v715 = vmul.f32 %v532, %v611
    %v716 = vmul.f32 %v536, %v611
    %v717 = vmul.f32 %v540, %v596
    %v718 = vmul.f32 %v544, %v596
    %v719 = vmul.f32 %v540, %v601
    %v720 = vmul.f32 %v544, %v601
    %v721 = vmul.f32 %v540, %v606
    %v722 = vmul.f32 %v544, %v606
    %v723 = vmul.f32 %v540, %v611
    %v724 = vmul.f32 %v544, %v611
    %v725 = vmul.f32 %v548, %v596
    %v726 = vmul.f32 %v552, %v596
    %v727 = vmul.f32 %v548, %v601
    %v728 = vmul.f32 %v552, %v601
    %v729 = vmul.f32 %v548, %v606
    %v730 = vmul.f32 %v552, %v606
    %v731 = vmul.f32 %v548, %v611
    %v732 = vmul.f32 %v552, %v611
    %v733 = vmul.f32 %v556, %v596
    %v734 = vmul.f32 %v560, %v596
    %v735 = vmul.f32 %v556, %v601
    %v736 = vmul.f32 %v560, %v601
    %v737 = vmul.f32 %v556, %v606
    %v738 = vmul.f32 %v560, %v606
    %v739 = vmul.f32 %v556, %v611
    %v740 = vmul.f32 %v560, %v611
    %v741 = vadd.f32 %v252, %v613
    %v742 = vadd.f32 %v253, %v614
    %v743 = vadd.f32 %v254, %v615
    %v744 = vadd.f32 %v255, %v616
    %v745 = vadd.f32 %v256, %v617
    %v746 = vadd.f32 %v257, %v618
    %v747 = vadd.f32 %v258, %v619
    %v748 = vadd.f32 %v259, %v620
    %v749 = vadd.f32 %v260, %v621
    %v750 = vadd.f32 %v261, %v622
    %v751 = vadd.f32 %v262, %v623
    %v752 = vadd.f32 %v263, %v624
    %v753 = vadd.f32 %v264, %v625
    %v754 = vadd.f32 %v265, %v626
    %v755 = vadd.f32 %v266, %v627
    %v756 = vadd.f32 %v267, %v628
    %v757 = vadd.f32 %v268, %v629
    %v758 = vadd.f32 %v269, %v630
    %v759 = vadd.f32 %v270, %v631
    %v760 = vadd.f32 %v271, %v632
    %v761 = vadd.f32 %v272, %v633
    %v762 = vadd.f32 %v273, %v634
    %v763 = vadd.f32 %v274, %v635
    %v764 = vadd.f32 %v275, %v636
    %v765 = vadd.f32 %v276, %v637
    %v766 = vadd.f32 %v277, %v638
    %v767 = vadd.f32 %v278, %v639
    %v768 = vadd.f32 %v279, %v640
    %v769 = vadd.f32 %v280, %v641
    %v770 = vadd.f32 %v281, %v642
    %v771 = vadd.f32 %v282, %v643
    %v772 = vadd.f32 %v283, %v644
    %v773 = vadd.f32 %v284, %v645
    %v774 = vadd.f32 %v285, %v646
    %v775 = vadd.f32 %v286, %v647
    %v776 = vadd.f32 %v287, %v648
    %v777 = vadd.f32 %v288, %v649
    %v778 = vadd.f32 %v289, %v650
    %v779 = vadd.f32 %v290, %v651
    %v780 = vadd.f32 %v291, %v652
    %v781 = vadd.f32 %v292, %v653
    %v782 = vadd.f32 %v293, %v654
    %v783 = vadd.f32 %v294, %v655
    %v784 = vadd.f32 %v295, %v656
    %v785 = vadd.f32 %v296, %v657
    %v786 = vadd.f32 %v297, %v658
    %v787 = vadd.f32 %v298, %v659
    %v788 = vadd.f32 %v299, %v660
    %v789 = vadd.f32 %v300, %v661
    %v790 = vadd.f32 %v301, %v662
    %v791 = vadd.f32 %v302, %v663
    %v792 = vadd.f32 %v303, %v664
    %v793 = vadd.f32 %v304, %v665
    %v794 = vadd.f32 %v305, %v666
    %v795 = vadd.f32 %v306, %v667
    %v796 = vadd.f32 %v307, %v668
    %v797 = vadd.f32 %v308, %v669
    %v798 = vadd.f32 %v309, %v670
    %v799 = vadd.f32 %v310, %v671
    %v800 = vadd.f32 %v311, %v672
    %v801 = vadd.f32 %v312, %v673
    %v802 = vadd.f32 %v313, %v674
    %v803 = vadd.f32 %v314, %v675
    %v804 = vadd.f32 %v315, %v676
    %v805 = vadd.f32 %v316, %v677
    %v806 = vadd.f32 %v317, %v678
    %v807 = vadd.f32 %v318, %v679
    %v808 = vadd.f32 %v319, %v680
    %v809 = vadd.f32 %v320, %v681
    %v810 = vadd.f32 %v321, %v682
    %v811 = vadd.f32 %v322, %v683
    %v812 = vadd.f32 %v323, %v684
    %v813 = vadd.f32 %v324, %v685
    %v814 = vadd.f32 %v325, %v686
    %v815 = vadd.f32 %v326, %v687
    %v816 = vadd.f32 %v327, %v688
    %v817 = vadd.f32 %v328, %v689
    %v818 = vadd.f32 %v329, %v690
    %v819 = vadd.f32 %v330, %v691
    %v820 = vadd.f32 %v331, %v692
    %v821 = vadd.f32 %v332, %v693
    %v822 = vadd.f32 %v333, %v694
    %v823 = vadd.f32 %v334, %v695
    %v824 = vadd.f32 %v335, %v696
    %v825 = vadd.f32 %v336, %v697
    %v826 = vadd.f32 %v337, %v698
    %v827 = vadd.f32 %v338, %v699
    %v828 = vadd.f32 %v339, %v700
    %v829 = vadd.f32 %v340, %v701
    %v830 = vadd.f32 %v341, %v702
    %v831 = vadd.f32 %v342, %v703
    %v832 = vadd.f32 %v343, %v704
    %v833 = vadd.f32 %v344, %v705
    %v834 = vadd.f32 %v345, %v706
    %v835 = vadd.f32 %v346, %v707
    %v836 = vadd.f32 %v347, %v708
    %v837 = vadd.f32 %v348, %v709
    %v838 = vadd.f32 %v349, %v710
    %v839 = vadd.f32 %v350, %v711
    %v840 = vadd.f32 %v351, %v712
    %v841 = vadd.f32 %v352, %v713
    %v842 = vadd.f32 %v353, %v714
    %v843 = vadd.f32 %v354, %v715
    %v844 = vadd.f32 %v355, %v716
    %v845 = vadd.f32 %v356, %v717
    %v846 = vadd.f32 %v357, %v718
    %v847 = vadd.f32 %v358, %v719
    %v848 = vadd.f32 %v359, %v720
    %v849 = vadd.f32 %v360, %v721
    %v850 = vadd.f32 %v361, %v722
    %v851 = vadd.f32 %v362, %v723
    %v852 = vadd.f32 %v363, %v724
    %v853 = vadd.f32 %v364, %v725
    %v854 = vadd.f32 %v365, %v726
    %v855 = vadd.f32 %v366, %v727
    %v856 = vadd.f32 %v367, %v728
    %v857 = vadd.f32 %v368, %v729
    %v858 = vadd.f32 %v369, %v730
    %v859 = vadd.f32 %v370, %v731
    %v860 = vadd.f32 %v371, %v732
    %v861 = vadd.f32 %v372, %v733
    %v862 = vadd.f32 %v373, %v734
    %v863 = vadd.f32 %v374, %v735
    %v864 = vadd.f32 %v375, %v736
    %v865 = vadd.f32 %v376, %v737
    %v866 = vadd.f32 %v377, %v738
    %v867 = vadd.f32 %v378, %v739
    %v868 = vadd.f32 %v379, %v740
    %s869 = scalar_lea.vmem %s0, 2
    %v870 = vld [vmem:[%s869] ss:$4 sm:$0x3]
    %s871 = scalar_lea.vmem %s0, 10
    %v872 = vld [vmem:[%s871] ss:$4 sm:$0x3]
    %s873 = scalar_lea.vmem %s0, 18
    %v874 = vld [vmem:[%s873] ss:$4 sm:$0x3]
    %s875 = scalar_lea.vmem %s0, 26
    %v876 = vld [vmem:[%s875] ss:$4 sm:$0x3]
    %s877 = scalar_lea.vmem %s0, 34
    %v878 = vld [vmem:[%s877] ss:$4 sm:$0x3]
    %s879 = scalar_lea.vmem %s0, 42
    %v880 = vld [vmem:[%s879] ss:$4 sm:$0x3]
    %s881 = scalar_lea.vmem %s0, 50
    %v882 = vld [vmem:[%s881] ss:$4 sm:$0x3]
    %s883 = scalar_lea.vmem %s0, 58
    %v884 = vld [vmem:[%s883] ss:$4 sm:$0x3]
    %s885 = scalar_lea.vmem %s0, 66
    %v886 = vld [vmem:[%s885] ss:$4 sm:$0x3]
    %s887 = scalar_lea.vmem %s0, 74
    %v888 = vld [vmem:[%s887] ss:$4 sm:$0x3]
    %s889 = scalar_lea.vmem %s0, 82
    %v890 = vld [vmem:[%s889] ss:$4 sm:$0x3]
    %s891 = scalar_lea.vmem %s0, 90
    %v892 = vld [vmem:[%s891] ss:$4 sm:$0x3]
    %s893 = scalar_lea.vmem %s0, 98
    %v894 = vld [vmem:[%s893] ss:$4 sm:$0x3]
    %s895 = scalar_lea.vmem %s0, 106
    %v896 = vld [vmem:[%s895] ss:$4 sm:$0x3]
    %s897 = scalar_lea.vmem %s0, 114
    %v898 = vld [vmem:[%s897] ss:$4 sm:$0x3]
    %s899 = scalar_lea.vmem %s0, 122
    %v900 = vld [vmem:[%s899] ss:$4 sm:$0x3]
    %s901 = scalar_lea.vmem %s1, 64
    %v902 = vld [vmem:[%s901] sm:$0xff]
    %v903 = vld [vmem:[%s901 + $0x8] sm:$0xff]
    %v904 = vld [vmem:[%s901 + $0x10] sm:$0xff]
    %v905 = vld [vmem:[%s901 + $0x18] sm:$0xff]
    %v922 = vlaneseq
    %v923 = vshrl.u32 %v922, 7
    %v924 = vsub.s32 0, %v923
    %v925 = vrot.slane %v870, %v924
    %v926 = vlaneseq
    %v927 = vshrl.u32 %v926, 7
    %v928 = vsub.s32 1, %v927
    %v929 = vrot.slane %v870, %v928
    %v930 = vlaneseq
    %v931 = vshrl.u32 %v930, 7
    %v932 = vsub.s32 0, %v931
    %v933 = vrot.slane %v872, %v932
    %v934 = vlaneseq
    %v935 = vshrl.u32 %v934, 7
    %v936 = vsub.s32 1, %v935
    %v937 = vrot.slane %v872, %v936
    %v938 = vlaneseq
    %v939 = vshrl.u32 %v938, 7
    %v940 = vsub.s32 0, %v939
    %v941 = vrot.slane %v874, %v940
    %v942 = vlaneseq
    %v943 = vshrl.u32 %v942, 7
    %v944 = vsub.s32 1, %v943
    %v945 = vrot.slane %v874, %v944
    %v946 = vlaneseq
    %v947 = vshrl.u32 %v946, 7
    %v948 = vsub.s32 0, %v947
    %v949 = vrot.slane %v876, %v948
    %v950 = vlaneseq
    %v951 = vshrl.u32 %v950, 7
    %v952 = vsub.s32 1, %v951
    %v953 = vrot.slane %v876, %v952
    %v954 = vlaneseq
    %v955 = vshrl.u32 %v954, 7
    %v956 = vsub.s32 0, %v955
    %v957 = vrot.slane %v878, %v956
    %v958 = vlaneseq
    %v959 = vshrl.u32 %v958, 7
    %v960 = vsub.s32 1, %v959
    %v961 = vrot.slane %v878, %v960
    %v962 = vlaneseq
    %v963 = vshrl.u32 %v962, 7
    %v964 = vsub.s32 0, %v963
    %v965 = vrot.slane %v880, %v964
    %v966 = vlaneseq
    %v967 = vshrl.u32 %v966, 7
    %v968 = vsub.s32 1, %v967
    %v969 = vrot.slane %v880, %v968
    %v970 = vlaneseq
    %v971 = vshrl.u32 %v970, 7
    %v972 = vsub.s32 0, %v971
    %v973 = vrot.slane %v882, %v972
    %v974 = vlaneseq
    %v975 = vshrl.u32 %v974, 7
    %v976 = vsub.s32 1, %v975
    %v977 = vrot.slane %v882, %v976
    %v978 = vlaneseq
    %v979 = vshrl.u32 %v978, 7
    %v980 = vsub.s32 0, %v979
    %v981 = vrot.slane %v884, %v980
    %v982 = vlaneseq
    %v983 = vshrl.u32 %v982, 7
    %v984 = vsub.s32 1, %v983
    %v985 = vrot.slane %v884, %v984
    %v986 = vlaneseq
    %v987 = vshrl.u32 %v986, 7
    %v988 = vsub.s32 0, %v987
    %v989 = vrot.slane %v886, %v988
    %v990 = vlaneseq
    %v991 = vshrl.u32 %v990, 7
    %v992 = vsub.s32 1, %v991
    %v993 = vrot.slane %v886, %v992
    %v994 = vlaneseq
    %v995 = vshrl.u32 %v994, 7
    %v996 = vsub.s32 0, %v995
    %v997 = vrot.slane %v888, %v996
    %v998 = vlaneseq
    %v999 = vshrl.u32 %v998, 7
    %v1000 = vsub.s32 1, %v999
    %v1001 = vrot.slane %v888, %v1000
    %v1002 = vlaneseq
    %v1003 = vshrl.u32 %v1002, 7
    %v1004 = vsub.s32 0, %v1003
    %v1005 = vrot.slane %v890, %v1004
    %v1006 = vlaneseq
    %v1007 = vshrl.u32 %v1006, 7
    %v1008 = vsub.s32 1, %v1007
    %v1009 = vrot.slane %v890, %v1008
    %v1010 = vlaneseq
    %v1011 = vshrl.u32 %v1010, 7
    %v1012 = vsub.s32 0, %v1011
    %v1013 = vrot.slane %v892, %v1012
    %v1014 = vlaneseq
    %v1015 = vshrl.u32 %v1014, 7
    %v1016 = vsub.s32 1, %v1015
    %v1017 = vrot.slane %v892, %v1016
    %v1018 = vlaneseq
    %v1019 = vshrl.u32 %v1018, 7
    %v1020 = vsub.s32 0, %v1019
    %v1021 = vrot.slane %v894, %v1020
    %v1022 = vlaneseq
    %v1023 = vshrl.u32 %v1022, 7
    %v1024 = vsub.s32 1, %v1023
    %v1025 = vrot.slane %v894, %v1024
    %v1026 = vlaneseq
    %v1027 = vshrl.u32 %v1026, 7
    %v1028 = vsub.s32 0, %v1027
    %v1029 = vrot.slane %v896, %v1028
    %v1030 = vlaneseq
    %v1031 = vshrl.u32 %v1030, 7
    %v1032 = vsub.s32 1, %v1031
    %v1033 = vrot.slane %v896, %v1032
    %v1034 = vlaneseq
    %v1035 = vshrl.u32 %v1034, 7
    %v1036 = vsub.s32 0, %v1035
    %v1037 = vrot.slane %v898, %v1036
    %v1038 = vlaneseq
    %v1039 = vshrl.u32 %v1038, 7
    %v1040 = vsub.s32 1, %v1039
    %v1041 = vrot.slane %v898, %v1040
    %v1042 = vlaneseq
    %v1043 = vshrl.u32 %v1042, 7
    %v1044 = vsub.s32 0, %v1043
    %v1045 = vrot.slane %v900, %v1044
    %v1046 = vlaneseq
    %v1047 = vshrl.u32 %v1046, 7
    %v1048 = vsub.s32 1, %v1047
    %v1049 = vrot.slane %v900, %v1048
    %1083 = vset.pattern.permute.xlu0 0
    %1084 = vperm.xlu0 %1083, %v902
    %v1085 = vpop.permute.xlu0 %1084
    %1088 = vset.pattern.permute.xlu0 0
    %1089 = vperm.xlu0 %1088, %v903
    %v1090 = vpop.permute.xlu0 %1089
    %1093 = vset.pattern.permute.xlu0 0
    %1094 = vperm.xlu0 %1093, %v904
    %v1095 = vpop.permute.xlu0 %1094
    %1098 = vset.pattern.permute.xlu0 0
    %1099 = vperm.xlu0 %1098, %v905
    %v1100 = vpop.permute.xlu0 %1099
    %v1102 = vmul.f32 %v925, %v1085
    %v1103 = vmul.f32 %v929, %v1085
    %v1104 = vmul.f32 %v925, %v1090
    %v1105 = vmul.f32 %v929, %v1090
    %v1106 = vmul.f32 %v925, %v1095
    %v1107 = vmul.f32 %v929, %v1095
    %v1108 = vmul.f32 %v925, %v1100
    %v1109 = vmul.f32 %v929, %v1100
    %v1110 = vmul.f32 %v933, %v1085
    %v1111 = vmul.f32 %v937, %v1085
    %v1112 = vmul.f32 %v933, %v1090
    %v1113 = vmul.f32 %v937, %v1090
    %v1114 = vmul.f32 %v933, %v1095
    %v1115 = vmul.f32 %v937, %v1095
    %v1116 = vmul.f32 %v933, %v1100
    %v1117 = vmul.f32 %v937, %v1100
    %v1118 = vmul.f32 %v941, %v1085
    %v1119 = vmul.f32 %v945, %v1085
    %v1120 = vmul.f32 %v941, %v1090
    %v1121 = vmul.f32 %v945, %v1090
    %v1122 = vmul.f32 %v941, %v1095
    %v1123 = vmul.f32 %v945, %v1095
    %v1124 = vmul.f32 %v941, %v1100
    %v1125 = vmul.f32 %v945, %v1100
    %v1126 = vmul.f32 %v949, %v1085
    %v1127 = vmul.f32 %v953, %v1085
    %v1128 = vmul.f32 %v949, %v1090
    %v1129 = vmul.f32 %v953, %v1090
    %v1130 = vmul.f32 %v949, %v1095
    %v1131 = vmul.f32 %v953, %v1095
    %v1132 = vmul.f32 %v949, %v1100
    %v1133 = vmul.f32 %v953, %v1100
    %v1134 = vmul.f32 %v957, %v1085
    %v1135 = vmul.f32 %v961, %v1085
    %v1136 = vmul.f32 %v957, %v1090
    %v1137 = vmul.f32 %v961, %v1090
    %v1138 = vmul.f32 %v957, %v1095
    %v1139 = vmul.f32 %v961, %v1095
    %v1140 = vmul.f32 %v957, %v1100
    %v1141 = vmul.f32 %v961, %v1100
    %v1142 = vmul.f32 %v965, %v1085
    %v1143 = vmul.f32 %v969, %v1085
    %v1144 = vmul.f32 %v965, %v1090
    %v1145 = vmul.f32 %v969, %v1090
    %v1146 = vmul.f32 %v965, %v1095
    %v1147 = vmul.f32 %v969, %v1095
    %v1148 = vmul.f32 %v965, %v1100
    %v1149 = vmul.f32 %v969, %v1100
    %v1150 = vmul.f32 %v973, %v1085
    %v1151 = vmul.f32 %v977, %v1085
    %v1152 = vmul.f32 %v973, %v1090
    %v1153 = vmul.f32 %v977, %v1090
    %v1154 = vmul.f32 %v973, %v1095
    %v1155 = vmul.f32 %v977, %v1095
    %v1156 = vmul.f32 %v973, %v1100
    %v1157 = vmul.f32 %v977, %v1100
    %v1158 = vmul.f32 %v981, %v1085
    %v1159 = vmul.f32 %v985, %v1085
    %v1160 = vmul.f32 %v981, %v1090
    %v1161 = vmul.f32 %v985, %v1090
    %v1162 = vmul.f32 %v981, %v1095
    %v1163 = vmul.f32 %v985, %v1095
    %v1164 = vmul.f32 %v981, %v1100
    %v1165 = vmul.f32 %v985, %v1100
    %v1166 = vmul.f32 %v989, %v1085
    %v1167 = vmul.f32 %v993, %v1085
    %v1168 = vmul.f32 %v989, %v1090
    %v1169 = vmul.f32 %v993, %v1090
    %v1170 = vmul.f32 %v989, %v1095
    %v1171 = vmul.f32 %v993, %v1095
    %v1172 = vmul.f32 %v989, %v1100
    %v1173 = vmul.f32 %v993, %v1100
    %v1174 = vmul.f32 %v997, %v1085
    %v1175 = vmul.f32 %v1001, %v1085
    %v1176 = vmul.f32 %v997, %v1090
    %v1177 = vmul.f32 %v1001, %v1090
    %v1178 = vmul.f32 %v997, %v1095
    %v1179 = vmul.f32 %v1001, %v1095
    %v1180 = vmul.f32 %v997, %v1100
    %v1181 = vmul.f32 %v1001, %v1100
    %v1182 = vmul.f32 %v1005, %v1085
    %v1183 = vmul.f32 %v1009, %v1085
    %v1184 = vmul.f32 %v1005, %v1090
    %v1185 = vmul.f32 %v1009, %v1090
    %v1186 = vmul.f32 %v1005, %v1095
    %v1187 = vmul.f32 %v1009, %v1095
    %v1188 = vmul.f32 %v1005, %v1100
    %v1189 = vmul.f32 %v1009, %v1100
    %v1190 = vmul.f32 %v1013, %v1085
    %v1191 = vmul.f32 %v1017, %v1085
    %v1192 = vmul.f32 %v1013, %v1090
    %v1193 = vmul.f32 %v1017, %v1090
    %v1194 = vmul.f32 %v1013, %v1095
    %v1195 = vmul.f32 %v1017, %v1095
    %v1196 = vmul.f32 %v1013, %v1100
    %v1197 = vmul.f32 %v1017, %v1100
    %v1198 = vmul.f32 %v1021, %v1085
    %v1199 = vmul.f32 %v1025, %v1085
    %v1200 = vmul.f32 %v1021, %v1090
    %v1201 = vmul.f32 %v1025, %v1090
    %v1202 = vmul.f32 %v1021, %v1095
    %v1203 = vmul.f32 %v1025, %v1095
    %v1204 = vmul.f32 %v1021, %v1100
    %v1205 = vmul.f32 %v1025, %v1100
    %v1206 = vmul.f32 %v1029, %v1085
    %v1207 = vmul.f32 %v1033, %v1085
    %v1208 = vmul.f32 %v1029, %v1090
    %v1209 = vmul.f32 %v1033, %v1090
    %v1210 = vmul.f32 %v1029, %v1095
    %v1211 = vmul.f32 %v1033, %v1095
    %v1212 = vmul.f32 %v1029, %v1100
    %v1213 = vmul.f32 %v1033, %v1100
    %v1214 = vmul.f32 %v1037, %v1085
    %v1215 = vmul.f32 %v1041, %v1085
    %v1216 = vmul.f32 %v1037, %v1090
    %v1217 = vmul.f32 %v1041, %v1090
    %v1218 = vmul.f32 %v1037, %v1095
    %v1219 = vmul.f32 %v1041, %v1095
    %v1220 = vmul.f32 %v1037, %v1100
    %v1221 = vmul.f32 %v1041, %v1100
    %v1222 = vmul.f32 %v1045, %v1085
    %v1223 = vmul.f32 %v1049, %v1085
    %v1224 = vmul.f32 %v1045, %v1090
    %v1225 = vmul.f32 %v1049, %v1090
    %v1226 = vmul.f32 %v1045, %v1095
    %v1227 = vmul.f32 %v1049, %v1095
    %v1228 = vmul.f32 %v1045, %v1100
    %v1229 = vmul.f32 %v1049, %v1100
    %v1230 = vadd.f32 %v741, %v1102
    %v1231 = vadd.f32 %v742, %v1103
    %v1232 = vadd.f32 %v743, %v1104
    %v1233 = vadd.f32 %v744, %v1105
    %v1234 = vadd.f32 %v745, %v1106
    %v1235 = vadd.f32 %v746, %v1107
    %v1236 = vadd.f32 %v747, %v1108
    %v1237 = vadd.f32 %v748, %v1109
    %v1238 = vadd.f32 %v749, %v1110
    %v1239 = vadd.f32 %v750, %v1111
    %v1240 = vadd.f32 %v751, %v1112
    %v1241 = vadd.f32 %v752, %v1113
    %v1242 = vadd.f32 %v753, %v1114
    %v1243 = vadd.f32 %v754, %v1115
    %v1244 = vadd.f32 %v755, %v1116
    %v1245 = vadd.f32 %v756, %v1117
    %v1246 = vadd.f32 %v757, %v1118
    %v1247 = vadd.f32 %v758, %v1119
    %v1248 = vadd.f32 %v759, %v1120
    %v1249 = vadd.f32 %v760, %v1121
    %v1250 = vadd.f32 %v761, %v1122
    %v1251 = vadd.f32 %v762, %v1123
    %v1252 = vadd.f32 %v763, %v1124
    %v1253 = vadd.f32 %v764, %v1125
    %v1254 = vadd.f32 %v765, %v1126
    %v1255 = vadd.f32 %v766, %v1127
    %v1256 = vadd.f32 %v767, %v1128
    %v1257 = vadd.f32 %v768, %v1129
    %v1258 = vadd.f32 %v769, %v1130
    %v1259 = vadd.f32 %v770, %v1131
    %v1260 = vadd.f32 %v771, %v1132
    %v1261 = vadd.f32 %v772, %v1133
    %v1262 = vadd.f32 %v773, %v1134
    %v1263 = vadd.f32 %v774, %v1135
    %v1264 = vadd.f32 %v775, %v1136
    %v1265 = vadd.f32 %v776, %v1137
    %v1266 = vadd.f32 %v777, %v1138
    %v1267 = vadd.f32 %v778, %v1139
    %v1268 = vadd.f32 %v779, %v1140
    %v1269 = vadd.f32 %v780, %v1141
    %v1270 = vadd.f32 %v781, %v1142
    %v1271 = vadd.f32 %v782, %v1143
    %v1272 = vadd.f32 %v783, %v1144
    %v1273 = vadd.f32 %v784, %v1145
    %v1274 = vadd.f32 %v785, %v1146
    %v1275 = vadd.f32 %v786, %v1147
    %v1276 = vadd.f32 %v787, %v1148
    %v1277 = vadd.f32 %v788, %v1149
    %v1278 = vadd.f32 %v789, %v1150
    %v1279 = vadd.f32 %v790, %v1151
    %v1280 = vadd.f32 %v791, %v1152
    %v1281 = vadd.f32 %v792, %v1153
    %v1282 = vadd.f32 %v793, %v1154
    %v1283 = vadd.f32 %v794, %v1155
    %v1284 = vadd.f32 %v795, %v1156
    %v1285 = vadd.f32 %v796, %v1157
    %v1286 = vadd.f32 %v797, %v1158
    %v1287 = vadd.f32 %v798, %v1159
    %v1288 = vadd.f32 %v799, %v1160
    %v1289 = vadd.f32 %v800, %v1161
    %v1290 = vadd.f32 %v801, %v1162
    %v1291 = vadd.f32 %v802, %v1163
    %v1292 = vadd.f32 %v803, %v1164
    %v1293 = vadd.f32 %v804, %v1165
    %v1294 = vadd.f32 %v805, %v1166
    %v1295 = vadd.f32 %v806, %v1167
    %v1296 = vadd.f32 %v807, %v1168
    %v1297 = vadd.f32 %v808, %v1169
    %v1298 = vadd.f32 %v809, %v1170
    %v1299 = vadd.f32 %v810, %v1171
    %v1300 = vadd.f32 %v811, %v1172
    %v1301 = vadd.f32 %v812, %v1173
    %v1302 = vadd.f32 %v813, %v1174
    %v1303 = vadd.f32 %v814, %v1175
    %v1304 = vadd.f32 %v815, %v1176
    %v1305 = vadd.f32 %v816, %v1177
    %v1306 = vadd.f32 %v817, %v1178
    %v1307 = vadd.f32 %v818, %v1179
    %v1308 = vadd.f32 %v819, %v1180
    %v1309 = vadd.f32 %v820, %v1181
    %v1310 = vadd.f32 %v821, %v1182
    %v1311 = vadd.f32 %v822, %v1183
    %v1312 = vadd.f32 %v823, %v1184
    %v1313 = vadd.f32 %v824, %v1185
    %v1314 = vadd.f32 %v825, %v1186
    %v1315 = vadd.f32 %v826, %v1187
    %v1316 = vadd.f32 %v827, %v1188
    %v1317 = vadd.f32 %v828, %v1189
    %v1318 = vadd.f32 %v829, %v1190
    %v1319 = vadd.f32 %v830, %v1191
    %v1320 = vadd.f32 %v831, %v1192
    %v1321 = vadd.f32 %v832, %v1193
    %v1322 = vadd.f32 %v833, %v1194
    %v1323 = vadd.f32 %v834, %v1195
    %v1324 = vadd.f32 %v835, %v1196
    %v1325 = vadd.f32 %v836, %v1197
    %v1326 = vadd.f32 %v837, %v1198
    %v1327 = vadd.f32 %v838, %v1199
    %v1328 = vadd.f32 %v839, %v1200
    %v1329 = vadd.f32 %v840, %v1201
    %v1330 = vadd.f32 %v841, %v1202
    %v1331 = vadd.f32 %v842, %v1203
    %v1332 = vadd.f32 %v843, %v1204
    %v1333 = vadd.f32 %v844, %v1205
    %v1334 = vadd.f32 %v845, %v1206
    %v1335 = vadd.f32 %v846, %v1207
    %v1336 = vadd.f32 %v847, %v1208
    %v1337 = vadd.f32 %v848, %v1209
    %v1338 = vadd.f32 %v849, %v1210
    %v1339 = vadd.f32 %v850, %v1211
    %v1340 = vadd.f32 %v851, %v1212
    %v1341 = vadd.f32 %v852, %v1213
    %v1342 = vadd.f32 %v853, %v1214
    %v1343 = vadd.f32 %v854, %v1215
    %v1344 = vadd.f32 %v855, %v1216
    %v1345 = vadd.f32 %v856, %v1217
    %v1346 = vadd.f32 %v857, %v1218
    %v1347 = vadd.f32 %v858, %v1219
    %v1348 = vadd.f32 %v859, %v1220
    %v1349 = vadd.f32 %v860, %v1221
    %v1350 = vadd.f32 %v861, %v1222
    %v1351 = vadd.f32 %v862, %v1223
    %v1352 = vadd.f32 %v863, %v1224
    %v1353 = vadd.f32 %v864, %v1225
    %v1354 = vadd.f32 %v865, %v1226
    %v1355 = vadd.f32 %v866, %v1227
    %v1356 = vadd.f32 %v867, %v1228
    %v1357 = vadd.f32 %v868, %v1229
    %s1358 = scalar_lea.vmem %s0, 3
    %v1359 = vld [vmem:[%s1358] ss:$4 sm:$0x3]
    %s1360 = scalar_lea.vmem %s0, 11
    %v1361 = vld [vmem:[%s1360] ss:$4 sm:$0x3]
    %s1362 = scalar_lea.vmem %s0, 19
    %v1363 = vld [vmem:[%s1362] ss:$4 sm:$0x3]
    %s1364 = scalar_lea.vmem %s0, 27
    %v1365 = vld [vmem:[%s1364] ss:$4 sm:$0x3]
    %s1366 = scalar_lea.vmem %s0, 35
    %v1367 = vld [vmem:[%s1366] ss:$4 sm:$0x3]
    %s1368 = scalar_lea.vmem %s0, 43
    %v1369 = vld [vmem:[%s1368] ss:$4 sm:$0x3]
    %s1370 = scalar_lea.vmem %s0, 51
    %v1371 = vld [vmem:[%s1370] ss:$4 sm:$0x3]
    %s1372 = scalar_lea.vmem %s0, 59
    %v1373 = vld [vmem:[%s1372] ss:$4 sm:$0x3]
    %s1374 = scalar_lea.vmem %s0, 67
    %v1375 = vld [vmem:[%s1374] ss:$4 sm:$0x3]
    %s1376 = scalar_lea.vmem %s0, 75
    %v1377 = vld [vmem:[%s1376] ss:$4 sm:$0x3]
    %s1378 = scalar_lea.vmem %s0, 83
    %v1379 = vld [vmem:[%s1378] ss:$4 sm:$0x3]
    %s1380 = scalar_lea.vmem %s0, 91
    %v1381 = vld [vmem:[%s1380] ss:$4 sm:$0x3]
    %s1382 = scalar_lea.vmem %s0, 99
    %v1383 = vld [vmem:[%s1382] ss:$4 sm:$0x3]
    %s1384 = scalar_lea.vmem %s0, 107
    %v1385 = vld [vmem:[%s1384] ss:$4 sm:$0x3]
    %s1386 = scalar_lea.vmem %s0, 115
    %v1387 = vld [vmem:[%s1386] ss:$4 sm:$0x3]
    %s1388 = scalar_lea.vmem %s0, 123
    %v1389 = vld [vmem:[%s1388] ss:$4 sm:$0x3]
    %s1390 = scalar_lea.vmem %s1, 96
    %v1391 = vld [vmem:[%s1390] sm:$0xff]
    %v1392 = vld [vmem:[%s1390 + $0x8] sm:$0xff]
    %v1393 = vld [vmem:[%s1390 + $0x10] sm:$0xff]
    %v1394 = vld [vmem:[%s1390 + $0x18] sm:$0xff]
    %v1411 = vlaneseq
    %v1412 = vshrl.u32 %v1411, 7
    %v1413 = vsub.s32 0, %v1412
    %v1414 = vrot.slane %v1359, %v1413
    %v1415 = vlaneseq
    %v1416 = vshrl.u32 %v1415, 7
    %v1417 = vsub.s32 1, %v1416
    %v1418 = vrot.slane %v1359, %v1417
    %v1419 = vlaneseq
    %v1420 = vshrl.u32 %v1419, 7
    %v1421 = vsub.s32 0, %v1420
    %v1422 = vrot.slane %v1361, %v1421
    %v1423 = vlaneseq
    %v1424 = vshrl.u32 %v1423, 7
    %v1425 = vsub.s32 1, %v1424
    %v1426 = vrot.slane %v1361, %v1425
    %v1427 = vlaneseq
    %v1428 = vshrl.u32 %v1427, 7
    %v1429 = vsub.s32 0, %v1428
    %v1430 = vrot.slane %v1363, %v1429
    %v1431 = vlaneseq
    %v1432 = vshrl.u32 %v1431, 7
    %v1433 = vsub.s32 1, %v1432
    %v1434 = vrot.slane %v1363, %v1433
    %v1435 = vlaneseq
    %v1436 = vshrl.u32 %v1435, 7
    %v1437 = vsub.s32 0, %v1436
    %v1438 = vrot.slane %v1365, %v1437
    %v1439 = vlaneseq
    %v1440 = vshrl.u32 %v1439, 7
    %v1441 = vsub.s32 1, %v1440
    %v1442 = vrot.slane %v1365, %v1441
    %v1443 = vlaneseq
    %v1444 = vshrl.u32 %v1443, 7
    %v1445 = vsub.s32 0, %v1444
    %v1446 = vrot.slane %v1367, %v1445
    %v1447 = vlaneseq
    %v1448 = vshrl.u32 %v1447, 7
    %v1449 = vsub.s32 1, %v1448
    %v1450 = vrot.slane %v1367, %v1449
    %v1451 = vlaneseq
    %v1452 = vshrl.u32 %v1451, 7
    %v1453 = vsub.s32 0, %v1452
    %v1454 = vrot.slane %v1369, %v1453
    %v1455 = vlaneseq
    %v1456 = vshrl.u32 %v1455, 7
    %v1457 = vsub.s32 1, %v1456
    %v1458 = vrot.slane %v1369, %v1457
    %v1459 = vlaneseq
    %v1460 = vshrl.u32 %v1459, 7
    %v1461 = vsub.s32 0, %v1460
    %v1462 = vrot.slane %v1371, %v1461
    %v1463 = vlaneseq
    %v1464 = vshrl.u32 %v1463, 7
    %v1465 = vsub.s32 1, %v1464
    %v1466 = vrot.slane %v1371, %v1465
    %v1467 = vlaneseq
    %v1468 = vshrl.u32 %v1467, 7
    %v1469 = vsub.s32 0, %v1468
    %v1470 = vrot.slane %v1373, %v1469
    %v1471 = vlaneseq
    %v1472 = vshrl.u32 %v1471, 7
    %v1473 = vsub.s32 1, %v1472
    %v1474 = vrot.slane %v1373, %v1473
    %v1475 = vlaneseq
    %v1476 = vshrl.u32 %v1475, 7
    %v1477 = vsub.s32 0, %v1476
    %v1478 = vrot.slane %v1375, %v1477
    %v1479 = vlaneseq
    %v1480 = vshrl.u32 %v1479, 7
    %v1481 = vsub.s32 1, %v1480
    %v1482 = vrot.slane %v1375, %v1481
    %v1483 = vlaneseq
    %v1484 = vshrl.u32 %v1483, 7
    %v1485 = vsub.s32 0, %v1484
    %v1486 = vrot.slane %v1377, %v1485
    %v1487 = vlaneseq
    %v1488 = vshrl.u32 %v1487, 7
    %v1489 = vsub.s32 1, %v1488
    %v1490 = vrot.slane %v1377, %v1489
    %v1491 = vlaneseq
    %v1492 = vshrl.u32 %v1491, 7
    %v1493 = vsub.s32 0, %v1492
    %v1494 = vrot.slane %v1379, %v1493
    %v1495 = vlaneseq
    %v1496 = vshrl.u32 %v1495, 7
    %v1497 = vsub.s32 1, %v1496
    %v1498 = vrot.slane %v1379, %v1497
    %v1499 = vlaneseq
    %v1500 = vshrl.u32 %v1499, 7
    %v1501 = vsub.s32 0, %v1500
    %v1502 = vrot.slane %v1381, %v1501
    %v1503 = vlaneseq
    %v1504 = vshrl.u32 %v1503, 7
    %v1505 = vsub.s32 1, %v1504
    %v1506 = vrot.slane %v1381, %v1505
    %v1507 = vlaneseq
    %v1508 = vshrl.u32 %v1507, 7
    %v1509 = vsub.s32 0, %v1508
    %v1510 = vrot.slane %v1383, %v1509
    %v1511 = vlaneseq
    %v1512 = vshrl.u32 %v1511, 7
    %v1513 = vsub.s32 1, %v1512
    %v1514 = vrot.slane %v1383, %v1513
    %v1515 = vlaneseq
    %v1516 = vshrl.u32 %v1515, 7
    %v1517 = vsub.s32 0, %v1516
    %v1518 = vrot.slane %v1385, %v1517
    %v1519 = vlaneseq
    %v1520 = vshrl.u32 %v1519, 7
    %v1521 = vsub.s32 1, %v1520
    %v1522 = vrot.slane %v1385, %v1521
    %v1523 = vlaneseq
    %v1524 = vshrl.u32 %v1523, 7
    %v1525 = vsub.s32 0, %v1524
    %v1526 = vrot.slane %v1387, %v1525
    %v1527 = vlaneseq
    %v1528 = vshrl.u32 %v1527, 7
    %v1529 = vsub.s32 1, %v1528
    %v1530 = vrot.slane %v1387, %v1529
    %v1531 = vlaneseq
    %v1532 = vshrl.u32 %v1531, 7
    %v1533 = vsub.s32 0, %v1532
    %v1534 = vrot.slane %v1389, %v1533
    %v1535 = vlaneseq
    %v1536 = vshrl.u32 %v1535, 7
    %v1537 = vsub.s32 1, %v1536
    %v1538 = vrot.slane %v1389, %v1537
    %1572 = vset.pattern.permute.xlu0 0
    %1573 = vperm.xlu0 %1572, %v1391
    %v1574 = vpop.permute.xlu0 %1573
    %1577 = vset.pattern.permute.xlu0 0
    %1578 = vperm.xlu0 %1577, %v1392
    %v1579 = vpop.permute.xlu0 %1578
    %1582 = vset.pattern.permute.xlu0 0
    %1583 = vperm.xlu0 %1582, %v1393
    %v1584 = vpop.permute.xlu0 %1583
    %1587 = vset.pattern.permute.xlu0 0
    %1588 = vperm.xlu0 %1587, %v1394
    %v1589 = vpop.permute.xlu0 %1588
    %v1591 = vmul.f32 %v1414, %v1574
    %v1592 = vmul.f32 %v1418, %v1574
    %v1593 = vmul.f32 %v1414, %v1579
    %v1594 = vmul.f32 %v1418, %v1579
    %v1595 = vmul.f32 %v1414, %v1584
    %v1596 = vmul.f32 %v1418, %v1584
    %v1597 = vmul.f32 %v1414, %v1589
    %v1598 = vmul.f32 %v1418, %v1589
    %v1599 = vmul.f32 %v1422, %v1574
    %v1600 = vmul.f32 %v1426, %v1574
    %v1601 = vmul.f32 %v1422, %v1579
    %v1602 = vmul.f32 %v1426, %v1579
    %v1603 = vmul.f32 %v1422, %v1584
    %v1604 = vmul.f32 %v1426, %v1584
    %v1605 = vmul.f32 %v1422, %v1589
    %v1606 = vmul.f32 %v1426, %v1589
    %v1607 = vmul.f32 %v1430, %v1574
    %v1608 = vmul.f32 %v1434, %v1574
    %v1609 = vmul.f32 %v1430, %v1579
    %v1610 = vmul.f32 %v1434, %v1579
    %v1611 = vmul.f32 %v1430, %v1584
    %v1612 = vmul.f32 %v1434, %v1584
    %v1613 = vmul.f32 %v1430, %v1589
    %v1614 = vmul.f32 %v1434, %v1589
    %v1615 = vmul.f32 %v1438, %v1574
    %v1616 = vmul.f32 %v1442, %v1574
    %v1617 = vmul.f32 %v1438, %v1579
    %v1618 = vmul.f32 %v1442, %v1579
    %v1619 = vmul.f32 %v1438, %v1584
    %v1620 = vmul.f32 %v1442, %v1584
    %v1621 = vmul.f32 %v1438, %v1589
    %v1622 = vmul.f32 %v1442, %v1589
    %v1623 = vmul.f32 %v1446, %v1574
    %v1624 = vmul.f32 %v1450, %v1574
    %v1625 = vmul.f32 %v1446, %v1579
    %v1626 = vmul.f32 %v1450, %v1579
    %v1627 = vmul.f32 %v1446, %v1584
    %v1628 = vmul.f32 %v1450, %v1584
    %v1629 = vmul.f32 %v1446, %v1589
    %v1630 = vmul.f32 %v1450, %v1589
    %v1631 = vmul.f32 %v1454, %v1574
    %v1632 = vmul.f32 %v1458, %v1574
    %v1633 = vmul.f32 %v1454, %v1579
    %v1634 = vmul.f32 %v1458, %v1579
    %v1635 = vmul.f32 %v1454, %v1584
    %v1636 = vmul.f32 %v1458, %v1584
    %v1637 = vmul.f32 %v1454, %v1589
    %v1638 = vmul.f32 %v1458, %v1589
    %v1639 = vmul.f32 %v1462, %v1574
    %v1640 = vmul.f32 %v1466, %v1574
    %v1641 = vmul.f32 %v1462, %v1579
    %v1642 = vmul.f32 %v1466, %v1579
    %v1643 = vmul.f32 %v1462, %v1584
    %v1644 = vmul.f32 %v1466, %v1584
    %v1645 = vmul.f32 %v1462, %v1589
    %v1646 = vmul.f32 %v1466, %v1589
    %v1647 = vmul.f32 %v1470, %v1574
    %v1648 = vmul.f32 %v1474, %v1574
    %v1649 = vmul.f32 %v1470, %v1579
    %v1650 = vmul.f32 %v1474, %v1579
    %v1651 = vmul.f32 %v1470, %v1584
    %v1652 = vmul.f32 %v1474, %v1584
    %v1653 = vmul.f32 %v1470, %v1589
    %v1654 = vmul.f32 %v1474, %v1589
    %v1655 = vmul.f32 %v1478, %v1574
    %v1656 = vmul.f32 %v1482, %v1574
    %v1657 = vmul.f32 %v1478, %v1579
    %v1658 = vmul.f32 %v1482, %v1579
    %v1659 = vmul.f32 %v1478, %v1584
    %v1660 = vmul.f32 %v1482, %v1584
    %v1661 = vmul.f32 %v1478, %v1589
    %v1662 = vmul.f32 %v1482, %v1589
    %v1663 = vmul.f32 %v1486, %v1574
    %v1664 = vmul.f32 %v1490, %v1574
    %v1665 = vmul.f32 %v1486, %v1579
    %v1666 = vmul.f32 %v1490, %v1579
    %v1667 = vmul.f32 %v1486, %v1584
    %v1668 = vmul.f32 %v1490, %v1584
    %v1669 = vmul.f32 %v1486, %v1589
    %v1670 = vmul.f32 %v1490, %v1589
    %v1671 = vmul.f32 %v1494, %v1574
    %v1672 = vmul.f32 %v1498, %v1574
    %v1673 = vmul.f32 %v1494, %v1579
    %v1674 = vmul.f32 %v1498, %v1579
    %v1675 = vmul.f32 %v1494, %v1584
    %v1676 = vmul.f32 %v1498, %v1584
    %v1677 = vmul.f32 %v1494, %v1589
    %v1678 = vmul.f32 %v1498, %v1589
    %v1679 = vmul.f32 %v1502, %v1574
    %v1680 = vmul.f32 %v1506, %v1574
    %v1681 = vmul.f32 %v1502, %v1579
    %v1682 = vmul.f32 %v1506, %v1579
    %v1683 = vmul.f32 %v1502, %v1584
    %v1684 = vmul.f32 %v1506, %v1584
    %v1685 = vmul.f32 %v1502, %v1589
    %v1686 = vmul.f32 %v1506, %v1589
    %v1687 = vmul.f32 %v1510, %v1574
    %v1688 = vmul.f32 %v1514, %v1574
    %v1689 = vmul.f32 %v1510, %v1579
    %v1690 = vmul.f32 %v1514, %v1579
    %v1691 = vmul.f32 %v1510, %v1584
    %v1692 = vmul.f32 %v1514, %v1584
    %v1693 = vmul.f32 %v1510, %v1589
    %v1694 = vmul.f32 %v1514, %v1589
    %v1695 = vmul.f32 %v1518, %v1574
    %v1696 = vmul.f32 %v1522, %v1574
    %v1697 = vmul.f32 %v1518, %v1579
    %v1698 = vmul.f32 %v1522, %v1579
    %v1699 = vmul.f32 %v1518, %v1584
    %v1700 = vmul.f32 %v1522, %v1584
    %v1701 = vmul.f32 %v1518, %v1589
    %v1702 = vmul.f32 %v1522, %v1589
    %v1703 = vmul.f32 %v1526, %v1574
    %v1704 = vmul.f32 %v1530, %v1574
    %v1705 = vmul.f32 %v1526, %v1579
    %v1706 = vmul.f32 %v1530, %v1579
    %v1707 = vmul.f32 %v1526, %v1584
    %v1708 = vmul.f32 %v1530, %v1584
    %v1709 = vmul.f32 %v1526, %v1589
    %v1710 = vmul.f32 %v1530, %v1589
    %v1711 = vmul.f32 %v1534, %v1574
    %v1712 = vmul.f32 %v1538, %v1574
    %v1713 = vmul.f32 %v1534, %v1579
    %v1714 = vmul.f32 %v1538, %v1579
    %v1715 = vmul.f32 %v1534, %v1584
    %v1716 = vmul.f32 %v1538, %v1584
    %v1717 = vmul.f32 %v1534, %v1589
    %v1718 = vmul.f32 %v1538, %v1589
    %v1719 = vadd.f32 %v1230, %v1591
    %v1720 = vadd.f32 %v1231, %v1592
    %v1721 = vadd.f32 %v1232, %v1593
    %v1722 = vadd.f32 %v1233, %v1594
    %v1723 = vadd.f32 %v1234, %v1595
    %v1724 = vadd.f32 %v1235, %v1596
    %v1725 = vadd.f32 %v1236, %v1597
    %v1726 = vadd.f32 %v1237, %v1598
    %v1727 = vadd.f32 %v1238, %v1599
    %v1728 = vadd.f32 %v1239, %v1600
    %v1729 = vadd.f32 %v1240, %v1601
    %v1730 = vadd.f32 %v1241, %v1602
    %v1731 = vadd.f32 %v1242, %v1603
    %v1732 = vadd.f32 %v1243, %v1604
    %v1733 = vadd.f32 %v1244, %v1605
    %v1734 = vadd.f32 %v1245, %v1606
    %v1735 = vadd.f32 %v1246, %v1607
    %v1736 = vadd.f32 %v1247, %v1608
    %v1737 = vadd.f32 %v1248, %v1609
    %v1738 = vadd.f32 %v1249, %v1610
    %v1739 = vadd.f32 %v1250, %v1611
    %v1740 = vadd.f32 %v1251, %v1612
    %v1741 = vadd.f32 %v1252, %v1613
    %v1742 = vadd.f32 %v1253, %v1614
    %v1743 = vadd.f32 %v1254, %v1615
    %v1744 = vadd.f32 %v1255, %v1616
    %v1745 = vadd.f32 %v1256, %v1617
    %v1746 = vadd.f32 %v1257, %v1618
    %v1747 = vadd.f32 %v1258, %v1619
    %v1748 = vadd.f32 %v1259, %v1620
    %v1749 = vadd.f32 %v1260, %v1621
    %v1750 = vadd.f32 %v1261, %v1622
    %v1751 = vadd.f32 %v1262, %v1623
    %v1752 = vadd.f32 %v1263, %v1624
    %v1753 = vadd.f32 %v1264, %v1625
    %v1754 = vadd.f32 %v1265, %v1626
    %v1755 = vadd.f32 %v1266, %v1627
    %v1756 = vadd.f32 %v1267, %v1628
    %v1757 = vadd.f32 %v1268, %v1629
    %v1758 = vadd.f32 %v1269, %v1630
    %v1759 = vadd.f32 %v1270, %v1631
    %v1760 = vadd.f32 %v1271, %v1632
    %v1761 = vadd.f32 %v1272, %v1633
    %v1762 = vadd.f32 %v1273, %v1634
    %v1763 = vadd.f32 %v1274, %v1635
    %v1764 = vadd.f32 %v1275, %v1636
    %v1765 = vadd.f32 %v1276, %v1637
    %v1766 = vadd.f32 %v1277, %v1638
    %v1767 = vadd.f32 %v1278, %v1639
    %v1768 = vadd.f32 %v1279, %v1640
    %v1769 = vadd.f32 %v1280, %v1641
    %v1770 = vadd.f32 %v1281, %v1642
    %v1771 = vadd.f32 %v1282, %v1643
    %v1772 = vadd.f32 %v1283, %v1644
    %v1773 = vadd.f32 %v1284, %v1645
    %v1774 = vadd.f32 %v1285, %v1646
    %v1775 = vadd.f32 %v1286, %v1647
    %v1776 = vadd.f32 %v1287, %v1648
    %v1777 = vadd.f32 %v1288, %v1649
    %v1778 = vadd.f32 %v1289, %v1650
    %v1779 = vadd.f32 %v1290, %v1651
    %v1780 = vadd.f32 %v1291, %v1652
    %v1781 = vadd.f32 %v1292, %v1653
    %v1782 = vadd.f32 %v1293, %v1654
    %v1783 = vadd.f32 %v1294, %v1655
    %v1784 = vadd.f32 %v1295, %v1656
    %v1785 = vadd.f32 %v1296, %v1657
    %v1786 = vadd.f32 %v1297, %v1658
    %v1787 = vadd.f32 %v1298, %v1659
    %v1788 = vadd.f32 %v1299, %v1660
    %v1789 = vadd.f32 %v1300, %v1661
    %v1790 = vadd.f32 %v1301, %v1662
    %v1791 = vadd.f32 %v1302, %v1663
    %v1792 = vadd.f32 %v1303, %v1664
    %v1793 = vadd.f32 %v1304, %v1665
    %v1794 = vadd.f32 %v1305, %v1666
    %v1795 = vadd.f32 %v1306, %v1667
    %v1796 = vadd.f32 %v1307, %v1668
    %v1797 = vadd.f32 %v1308, %v1669
    %v1798 = vadd.f32 %v1309, %v1670
    %v1799 = vadd.f32 %v1310, %v1671
    %v1800 = vadd.f32 %v1311, %v1672
    %v1801 = vadd.f32 %v1312, %v1673
    %v1802 = vadd.f32 %v1313, %v1674
    %v1803 = vadd.f32 %v1314, %v1675
    %v1804 = vadd.f32 %v1315, %v1676
    %v1805 = vadd.f32 %v1316, %v1677
    %v1806 = vadd.f32 %v1317, %v1678
    %v1807 = vadd.f32 %v1318, %v1679
    %v1808 = vadd.f32 %v1319, %v1680
    %v1809 = vadd.f32 %v1320, %v1681
    %v1810 = vadd.f32 %v1321, %v1682
    %v1811 = vadd.f32 %v1322, %v1683
    %v1812 = vadd.f32 %v1323, %v1684
    %v1813 = vadd.f32 %v1324, %v1685
    %v1814 = vadd.f32 %v1325, %v1686
    %v1815 = vadd.f32 %v1326, %v1687
    %v1816 = vadd.f32 %v1327, %v1688
    %v1817 = vadd.f32 %v1328, %v1689
    %v1818 = vadd.f32 %v1329, %v1690
    %v1819 = vadd.f32 %v1330, %v1691
    %v1820 = vadd.f32 %v1331, %v1692
    %v1821 = vadd.f32 %v1332, %v1693
    %v1822 = vadd.f32 %v1333, %v1694
    %v1823 = vadd.f32 %v1334, %v1695
    %v1824 = vadd.f32 %v1335, %v1696
    %v1825 = vadd.f32 %v1336, %v1697
    %v1826 = vadd.f32 %v1337, %v1698
    %v1827 = vadd.f32 %v1338, %v1699
    %v1828 = vadd.f32 %v1339, %v1700
    %v1829 = vadd.f32 %v1340, %v1701
    %v1830 = vadd.f32 %v1341, %v1702
    %v1831 = vadd.f32 %v1342, %v1703
    %v1832 = vadd.f32 %v1343, %v1704
    %v1833 = vadd.f32 %v1344, %v1705
    %v1834 = vadd.f32 %v1345, %v1706
    %v1835 = vadd.f32 %v1346, %v1707
    %v1836 = vadd.f32 %v1347, %v1708
    %v1837 = vadd.f32 %v1348, %v1709
    %v1838 = vadd.f32 %v1349, %v1710
    %v1839 = vadd.f32 %v1350, %v1711
    %v1840 = vadd.f32 %v1351, %v1712
    %v1841 = vadd.f32 %v1352, %v1713
    %v1842 = vadd.f32 %v1353, %v1714
    %v1843 = vadd.f32 %v1354, %v1715
    %v1844 = vadd.f32 %v1355, %v1716
    %v1845 = vadd.f32 %v1356, %v1717
    %v1846 = vadd.f32 %v1357, %v1718
    %v1847 = vld [vmem:[%s2] sm:$0xff]
    %v1848 = vld [vmem:[%s2 + $0x8] sm:$0xff]
    %v1849 = vld [vmem:[%s2 + $0x10] sm:$0xff]
    %v1850 = vld [vmem:[%s2 + $0x18] sm:$0xff]
    %1852 = vset.pattern.permute.xlu0 0
    %1853 = vperm.xlu0 %1852, %v1847
    %v1854 = vpop.permute.xlu0 %1853
    %1857 = vset.pattern.permute.xlu0 0
    %1858 = vperm.xlu0 %1857, %v1848
    %v1859 = vpop.permute.xlu0 %1858
    %1862 = vset.pattern.permute.xlu0 0
    %1863 = vperm.xlu0 %1862, %v1849
    %v1864 = vpop.permute.xlu0 %1863
    %1867 = vset.pattern.permute.xlu0 0
    %1868 = vperm.xlu0 %1867, %v1850
    %v1869 = vpop.permute.xlu0 %1868
    %v1871 = vadd.f32 %v1719, %v1854
    %v1872 = vadd.f32 %v1720, %v1854
    %v1873 = vadd.f32 %v1721, %v1859
    %v1874 = vadd.f32 %v1722, %v1859
    %v1875 = vadd.f32 %v1723, %v1864
    %v1876 = vadd.f32 %v1724, %v1864
    %v1877 = vadd.f32 %v1725, %v1869
    %v1878 = vadd.f32 %v1726, %v1869
    %v1879 = vadd.f32 %v1727, %v1854
    %v1880 = vadd.f32 %v1728, %v1854
    %v1881 = vadd.f32 %v1729, %v1859
    %v1882 = vadd.f32 %v1730, %v1859
    %v1883 = vadd.f32 %v1731, %v1864
    %v1884 = vadd.f32 %v1732, %v1864
    %v1885 = vadd.f32 %v1733, %v1869
    %v1886 = vadd.f32 %v1734, %v1869
    %v1887 = vadd.f32 %v1735, %v1854
    %v1888 = vadd.f32 %v1736, %v1854
    %v1889 = vadd.f32 %v1737, %v1859
    %v1890 = vadd.f32 %v1738, %v1859
    %v1891 = vadd.f32 %v1739, %v1864
    %v1892 = vadd.f32 %v1740, %v1864
    %v1893 = vadd.f32 %v1741, %v1869
    %v1894 = vadd.f32 %v1742, %v1869
    %v1895 = vadd.f32 %v1743, %v1854
    %v1896 = vadd.f32 %v1744, %v1854
    %v1897 = vadd.f32 %v1745, %v1859
    %v1898 = vadd.f32 %v1746, %v1859
    %v1899 = vadd.f32 %v1747, %v1864
    %v1900 = vadd.f32 %v1748, %v1864
    %v1901 = vadd.f32 %v1749, %v1869
    %v1902 = vadd.f32 %v1750, %v1869
    %v1903 = vadd.f32 %v1751, %v1854
    %v1904 = vadd.f32 %v1752, %v1854
    %v1905 = vadd.f32 %v1753, %v1859
    %v1906 = vadd.f32 %v1754, %v1859
    %v1907 = vadd.f32 %v1755, %v1864
    %v1908 = vadd.f32 %v1756, %v1864
    %v1909 = vadd.f32 %v1757, %v1869
    %v1910 = vadd.f32 %v1758, %v1869
    %v1911 = vadd.f32 %v1759, %v1854
    %v1912 = vadd.f32 %v1760, %v1854
    %v1913 = vadd.f32 %v1761, %v1859
    %v1914 = vadd.f32 %v1762, %v1859
    %v1915 = vadd.f32 %v1763, %v1864
    %v1916 = vadd.f32 %v1764, %v1864
    %v1917 = vadd.f32 %v1765, %v1869
    %v1918 = vadd.f32 %v1766, %v1869
    %v1919 = vadd.f32 %v1767, %v1854
    %v1920 = vadd.f32 %v1768, %v1854
    %v1921 = vadd.f32 %v1769, %v1859
    %v1922 = vadd.f32 %v1770, %v1859
    %v1923 = vadd.f32 %v1771, %v1864
    %v1924 = vadd.f32 %v1772, %v1864
    %v1925 = vadd.f32 %v1773, %v1869
    %v1926 = vadd.f32 %v1774, %v1869
    %v1927 = vadd.f32 %v1775, %v1854
    %v1928 = vadd.f32 %v1776, %v1854
    %v1929 = vadd.f32 %v1777, %v1859
    %v1930 = vadd.f32 %v1778, %v1859
    %v1931 = vadd.f32 %v1779, %v1864
    %v1932 = vadd.f32 %v1780, %v1864
    %v1933 = vadd.f32 %v1781, %v1869
    %v1934 = vadd.f32 %v1782, %v1869
    %v1935 = vadd.f32 %v1783, %v1854
    %v1936 = vadd.f32 %v1784, %v1854
    %v1937 = vadd.f32 %v1785, %v1859
    %v1938 = vadd.f32 %v1786, %v1859
    %v1939 = vadd.f32 %v1787, %v1864
    %v1940 = vadd.f32 %v1788, %v1864
    %v1941 = vadd.f32 %v1789, %v1869
    %v1942 = vadd.f32 %v1790, %v1869
    %v1943 = vadd.f32 %v1791, %v1854
    %v1944 = vadd.f32 %v1792, %v1854
    %v1945 = vadd.f32 %v1793, %v1859
    %v1946 = vadd.f32 %v1794, %v1859
    %v1947 = vadd.f32 %v1795, %v1864
    %v1948 = vadd.f32 %v1796, %v1864
    %v1949 = vadd.f32 %v1797, %v1869
    %v1950 = vadd.f32 %v1798, %v1869
    %v1951 = vadd.f32 %v1799, %v1854
    %v1952 = vadd.f32 %v1800, %v1854
    %v1953 = vadd.f32 %v1801, %v1859
    %v1954 = vadd.f32 %v1802, %v1859
    %v1955 = vadd.f32 %v1803, %v1864
    %v1956 = vadd.f32 %v1804, %v1864
    %v1957 = vadd.f32 %v1805, %v1869
    %v1958 = vadd.f32 %v1806, %v1869
    %v1959 = vadd.f32 %v1807, %v1854
    %v1960 = vadd.f32 %v1808, %v1854
    %v1961 = vadd.f32 %v1809, %v1859
    %v1962 = vadd.f32 %v1810, %v1859
    %v1963 = vadd.f32 %v1811, %v1864
    %v1964 = vadd.f32 %v1812, %v1864
    %v1965 = vadd.f32 %v1813, %v1869
    %v1966 = vadd.f32 %v1814, %v1869
    %v1967 = vadd.f32 %v1815, %v1854
    %v1968 = vadd.f32 %v1816, %v1854
    %v1969 = vadd.f32 %v1817, %v1859
    %v1970 = vadd.f32 %v1818, %v1859
    %v1971 = vadd.f32 %v1819, %v1864
    %v1972 = vadd.f32 %v1820, %v1864
    %v1973 = vadd.f32 %v1821, %v1869
    %v1974 = vadd.f32 %v1822, %v1869
    %v1975 = vadd.f32 %v1823, %v1854
    %v1976 = vadd.f32 %v1824, %v1854
    %v1977 = vadd.f32 %v1825, %v1859
    %v1978 = vadd.f32 %v1826, %v1859
    %v1979 = vadd.f32 %v1827, %v1864
    %v1980 = vadd.f32 %v1828, %v1864
    %v1981 = vadd.f32 %v1829, %v1869
    %v1982 = vadd.f32 %v1830, %v1869
    %v1983 = vadd.f32 %v1831, %v1854
    %v1984 = vadd.f32 %v1832, %v1854
    %v1985 = vadd.f32 %v1833, %v1859
    %v1986 = vadd.f32 %v1834, %v1859
    %v1987 = vadd.f32 %v1835, %v1864
    %v1988 = vadd.f32 %v1836, %v1864
    %v1989 = vadd.f32 %v1837, %v1869
    %v1990 = vadd.f32 %v1838, %v1869
    %v1991 = vadd.f32 %v1839, %v1854
    %v1992 = vadd.f32 %v1840, %v1854
    %v1993 = vadd.f32 %v1841, %v1859
    %v1994 = vadd.f32 %v1842, %v1859
    %v1995 = vadd.f32 %v1843, %v1864
    %v1996 = vadd.f32 %v1844, %v1864
    %v1997 = vadd.f32 %v1845, %v1869
    %v1998 = vadd.f32 %v1846, %v1869
    %v1999 = vmax.f32 %v1871, 0.0
    %v2000 = vmax.f32 %v1872, 0.0
    %v2001 = vmax.f32 %v1873, 0.0
    %v2002 = vmax.f32 %v1874, 0.0
    %v2003 = vmax.f32 %v1875, 0.0
    %v2004 = vmax.f32 %v1876, 0.0
    %v2005 = vmax.f32 %v1877, 0.0
    %v2006 = vmax.f32 %v1878, 0.0
    %v2007 = vmax.f32 %v1879, 0.0
    %v2008 = vmax.f32 %v1880, 0.0
    %v2009 = vmax.f32 %v1881, 0.0
    %v2010 = vmax.f32 %v1882, 0.0
    %v2011 = vmax.f32 %v1883, 0.0
    %v2012 = vmax.f32 %v1884, 0.0
    %v2013 = vmax.f32 %v1885, 0.0
    %v2014 = vmax.f32 %v1886, 0.0
    %v2015 = vmax.f32 %v1887, 0.0
    %v2016 = vmax.f32 %v1888, 0.0
    %v2017 = vmax.f32 %v1889, 0.0
    %v2018 = vmax.f32 %v1890, 0.0
    %v2019 = vmax.f32 %v1891, 0.0
    %v2020 = vmax.f32 %v1892, 0.0
    %v2021 = vmax.f32 %v1893, 0.0
    %v2022 = vmax.f32 %v1894, 0.0
    %v2023 = vmax.f32 %v1895, 0.0
    %v2024 = vmax.f32 %v1896, 0.0
    %v2025 = vmax.f32 %v1897, 0.0
    %v2026 = vmax.f32 %v1898, 0.0
    %v2027 = vmax.f32 %v1899, 0.0
    %v2028 = vmax.f32 %v1900, 0.0
    %v2029 = vmax.f32 %v1901, 0.0
    %v2030 = vmax.f32 %v1902, 0.0
    %v2031 = vmax.f32 %v1903, 0.0
    %v2032 = vmax.f32 %v1904, 0.0
    %v2033 = vmax.f32 %v1905, 0.0
    %v2034 = vmax.f32 %v1906, 0.0
    %v2035 = vmax.f32 %v1907, 0.0
    %v2036 = vmax.f32 %v1908, 0.0
    %v2037 = vmax.f32 %v1909, 0.0
    %v2038 = vmax.f32 %v1910, 0.0
    %v2039 = vmax.f32 %v1911, 0.0
    %v2040 = vmax.f32 %v1912, 0.0
    %v2041 = vmax.f32 %v1913, 0.0
    %v2042 = vmax.f32 %v1914, 0.0
    %v2043 = vmax.f32 %v1915, 0.0
    %v2044 = vmax.f32 %v1916, 0.0
    %v2045 = vmax.f32 %v1917, 0.0
    %v2046 = vmax.f32 %v1918, 0.0
    %v2047 = vmax.f32 %v1919, 0.0
    %v2048 = vmax.f32 %v1920, 0.0
    %v2049 = vmax.f32 %v1921, 0.0
    %v2050 = vmax.f32 %v1922, 0.0
    %v2051 = vmax.f32 %v1923, 0.0
    %v2052 = vmax.f32 %v1924, 0.0
    %v2053 = vmax.f32 %v1925, 0.0
    %v2054 = vmax.f32 %v1926, 0.0
    %v2055 = vmax.f32 %v1927, 0.0
    %v2056 = vmax.f32 %v1928, 0.0
    %v2057 = vmax.f32 %v1929, 0.0
    %v2058 = vmax.f32 %v1930, 0.0
    %v2059 = vmax.f32 %v1931, 0.0
    %v2060 = vmax.f32 %v1932, 0.0
    %v2061 = vmax.f32 %v1933, 0.0
    %v2062 = vmax.f32 %v1934, 0.0
    %v2063 = vmax.f32 %v1935, 0.0
    %v2064 = vmax.f32 %v1936, 0.0
    %v2065 = vmax.f32 %v1937, 0.0
    %v2066 = vmax.f32 %v1938, 0.0
    %v2067 = vmax.f32 %v1939, 0.0
    %v2068 = vmax.f32 %v1940, 0.0
    %v2069 = vmax.f32 %v1941, 0.0
    %v2070 = vmax.f32 %v1942, 0.0
    %v2071 = vmax.f32 %v1943, 0.0
    %v2072 = vmax.f32 %v1944, 0.0
    %v2073 = vmax.f32 %v1945, 0.0
    %v2074 = vmax.f32 %v1946, 0.0
    %v2075 = vmax.f32 %v1947, 0.0
    %v2076 = vmax.f32 %v1948, 0.0
    %v2077 = vmax.f32 %v1949, 0.0
    %v2078 = vmax.f32 %v1950, 0.0
    %v2079 = vmax.f32 %v1951, 0.0
    %v2080 = vmax.f32 %v1952, 0.0
    %v2081 = vmax.f32 %v1953, 0.0
    %v2082 = vmax.f32 %v1954, 0.0
    %v2083 = vmax.f32 %v1955, 0.0
    %v2084 = vmax.f32 %v1956, 0.0
    %v2085 = vmax.f32 %v1957, 0.0
    %v2086 = vmax.f32 %v1958, 0.0
    %v2087 = vmax.f32 %v1959, 0.0
    %v2088 = vmax.f32 %v1960, 0.0
    %v2089 = vmax.f32 %v1961, 0.0
    %v2090 = vmax.f32 %v1962, 0.0
    %v2091 = vmax.f32 %v1963, 0.0
    %v2092 = vmax.f32 %v1964, 0.0
    %v2093 = vmax.f32 %v1965, 0.0
    %v2094 = vmax.f32 %v1966, 0.0
    %v2095 = vmax.f32 %v1967, 0.0
    %v2096 = vmax.f32 %v1968, 0.0
    %v2097 = vmax.f32 %v1969, 0.0
    %v2098 = vmax.f32 %v1970, 0.0
    %v2099 = vmax.f32 %v1971, 0.0
    %v2100 = vmax.f32 %v1972, 0.0
    %v2101 = vmax.f32 %v1973, 0.0
    %v2102 = vmax.f32 %v1974, 0.0
    %v2103 = vmax.f32 %v1975, 0.0
    %v2104 = vmax.f32 %v1976, 0.0
    %v2105 = vmax.f32 %v1977, 0.0
    %v2106 = vmax.f32 %v1978, 0.0
    %v2107 = vmax.f32 %v1979, 0.0
    %v2108 = vmax.f32 %v1980, 0.0
    %v2109 = vmax.f32 %v1981, 0.0
    %v2110 = vmax.f32 %v1982, 0.0
    %v2111 = vmax.f32 %v1983, 0.0
    %v2112 = vmax.f32 %v1984, 0.0
    %v2113 = vmax.f32 %v1985, 0.0
    %v2114 = vmax.f32 %v1986, 0.0
    %v2115 = vmax.f32 %v1987, 0.0
    %v2116 = vmax.f32 %v1988, 0.0
    %v2117 = vmax.f32 %v1989, 0.0
    %v2118 = vmax.f32 %v1990, 0.0
    %v2119 = vmax.f32 %v1991, 0.0
    %v2120 = vmax.f32 %v1992, 0.0
    %v2121 = vmax.f32 %v1993, 0.0
    %v2122 = vmax.f32 %v1994, 0.0
    %v2123 = vmax.f32 %v1995, 0.0
    %v2124 = vmax.f32 %v1996, 0.0
    %v2125 = vmax.f32 %v1997, 0.0
    %v2126 = vmax.f32 %v1998, 0.0
    %v2127 = vadd.f32 %v1999, %v2000
    %v2128 = vadd.f32 %v2001, %v2002
    %v2129 = vadd.f32 %v2003, %v2004
    %v2130 = vadd.f32 %v2005, %v2006
    %v2131 = vadd.f32 %v2007, %v2008
    %v2132 = vadd.f32 %v2009, %v2010
    %v2133 = vadd.f32 %v2011, %v2012
    %v2134 = vadd.f32 %v2013, %v2014
    %v2135 = vadd.f32 %v2015, %v2016
    %v2136 = vadd.f32 %v2017, %v2018
    %v2137 = vadd.f32 %v2019, %v2020
    %v2138 = vadd.f32 %v2021, %v2022
    %v2139 = vadd.f32 %v2023, %v2024
    %v2140 = vadd.f32 %v2025, %v2026
    %v2141 = vadd.f32 %v2027, %v2028
    %v2142 = vadd.f32 %v2029, %v2030
    %v2143 = vadd.f32 %v2031, %v2032
    %v2144 = vadd.f32 %v2033, %v2034
    %v2145 = vadd.f32 %v2035, %v2036
    %v2146 = vadd.f32 %v2037, %v2038
    %v2147 = vadd.f32 %v2039, %v2040
    %v2148 = vadd.f32 %v2041, %v2042
    %v2149 = vadd.f32 %v2043, %v2044
    %v2150 = vadd.f32 %v2045, %v2046
    %v2151 = vadd.f32 %v2047, %v2048
    %v2152 = vadd.f32 %v2049, %v2050
    %v2153 = vadd.f32 %v2051, %v2052
    %v2154 = vadd.f32 %v2053, %v2054
    %v2155 = vadd.f32 %v2055, %v2056
    %v2156 = vadd.f32 %v2057, %v2058
    %v2157 = vadd.f32 %v2059, %v2060
    %v2158 = vadd.f32 %v2061, %v2062
    %v2159 = vadd.f32 %v2063, %v2064
    %v2160 = vadd.f32 %v2065, %v2066
    %v2161 = vadd.f32 %v2067, %v2068
    %v2162 = vadd.f32 %v2069, %v2070
    %v2163 = vadd.f32 %v2071, %v2072
    %v2164 = vadd.f32 %v2073, %v2074
    %v2165 = vadd.f32 %v2075, %v2076
    %v2166 = vadd.f32 %v2077, %v2078
    %v2167 = vadd.f32 %v2079, %v2080
    %v2168 = vadd.f32 %v2081, %v2082
    %v2169 = vadd.f32 %v2083, %v2084
    %v2170 = vadd.f32 %v2085, %v2086
    %v2171 = vadd.f32 %v2087, %v2088
    %v2172 = vadd.f32 %v2089, %v2090
    %v2173 = vadd.f32 %v2091, %v2092
    %v2174 = vadd.f32 %v2093, %v2094
    %v2175 = vadd.f32 %v2095, %v2096
    %v2176 = vadd.f32 %v2097, %v2098
    %v2177 = vadd.f32 %v2099, %v2100
    %v2178 = vadd.f32 %v2101, %v2102
    %v2179 = vadd.f32 %v2103, %v2104
    %v2180 = vadd.f32 %v2105, %v2106
    %v2181 = vadd.f32 %v2107, %v2108
    %v2182 = vadd.f32 %v2109, %v2110
    %v2183 = vadd.f32 %v2111, %v2112
    %v2184 = vadd.f32 %v2113, %v2114
    %v2185 = vadd.f32 %v2115, %v2116
    %v2186 = vadd.f32 %v2117, %v2118
    %v2187 = vadd.f32 %v2119, %v2120
    %v2188 = vadd.f32 %v2121, %v2122
    %v2189 = vadd.f32 %v2123, %v2124
    %v2190 = vadd.f32 %v2125, %v2126
    %2191 = vadd.xlane.f32.xlu0 %v2127
    %v2192 = vpop.xlane.xlu0 %2191
    %2193 = vadd.xlane.f32.xlu0 %v2128
    %v2194 = vpop.xlane.xlu0 %2193
    %2195 = vadd.xlane.f32.xlu0 %v2129
    %v2196 = vpop.xlane.xlu0 %2195
    %2197 = vadd.xlane.f32.xlu0 %v2130
    %v2198 = vpop.xlane.xlu0 %2197
    %2199 = vadd.xlane.f32.xlu0 %v2131
    %v2200 = vpop.xlane.xlu0 %2199
    %2201 = vadd.xlane.f32.xlu0 %v2132
    %v2202 = vpop.xlane.xlu0 %2201
    %2203 = vadd.xlane.f32.xlu0 %v2133
    %v2204 = vpop.xlane.xlu0 %2203
    %2205 = vadd.xlane.f32.xlu0 %v2134
    %v2206 = vpop.xlane.xlu0 %2205
    %2207 = vadd.xlane.f32.xlu0 %v2135
    %v2208 = vpop.xlane.xlu0 %2207
    %2209 = vadd.xlane.f32.xlu0 %v2136
    %v2210 = vpop.xlane.xlu0 %2209
    %2211 = vadd.xlane.f32.xlu0 %v2137
    %v2212 = vpop.xlane.xlu0 %2211
    %2213 = vadd.xlane.f32.xlu0 %v2138
    %v2214 = vpop.xlane.xlu0 %2213
    %2215 = vadd.xlane.f32.xlu0 %v2139
    %v2216 = vpop.xlane.xlu0 %2215
    %2217 = vadd.xlane.f32.xlu0 %v2140
    %v2218 = vpop.xlane.xlu0 %2217
    %2219 = vadd.xlane.f32.xlu0 %v2141
    %v2220 = vpop.xlane.xlu0 %2219
    %2221 = vadd.xlane.f32.xlu0 %v2142
    %v2222 = vpop.xlane.xlu0 %2221
    %2223 = vadd.xlane.f32.xlu0 %v2143
    %v2224 = vpop.xlane.xlu0 %2223
    %2225 = vadd.xlane.f32.xlu0 %v2144
    %v2226 = vpop.xlane.xlu0 %2225
    %2227 = vadd.xlane.f32.xlu0 %v2145
    %v2228 = vpop.xlane.xlu0 %2227
    %2229 = vadd.xlane.f32.xlu0 %v2146
    %v2230 = vpop.xlane.xlu0 %2229
    %2231 = vadd.xlane.f32.xlu0 %v2147
    %v2232 = vpop.xlane.xlu0 %2231
    %2233 = vadd.xlane.f32.xlu0 %v2148
    %v2234 = vpop.xlane.xlu0 %2233
    %2235 = vadd.xlane.f32.xlu0 %v2149
    %v2236 = vpop.xlane.xlu0 %2235
    %2237 = vadd.xlane.f32.xlu0 %v2150
    %v2238 = vpop.xlane.xlu0 %2237
    %2239 = vadd.xlane.f32.xlu0 %v2151
    %v2240 = vpop.xlane.xlu0 %2239
    %2241 = vadd.xlane.f32.xlu0 %v2152
    %v2242 = vpop.xlane.xlu0 %2241
    %2243 = vadd.xlane.f32.xlu0 %v2153
    %v2244 = vpop.xlane.xlu0 %2243
    %2245 = vadd.xlane.f32.xlu0 %v2154
    %v2246 = vpop.xlane.xlu0 %2245
    %2247 = vadd.xlane.f32.xlu0 %v2155
    %v2248 = vpop.xlane.xlu0 %2247
    %2249 = vadd.xlane.f32.xlu0 %v2156
    %v2250 = vpop.xlane.xlu0 %2249
    %2251 = vadd.xlane.f32.xlu0 %v2157
    %v2252 = vpop.xlane.xlu0 %2251
    %2253 = vadd.xlane.f32.xlu0 %v2158
    %v2254 = vpop.xlane.xlu0 %2253
    %2255 = vadd.xlane.f32.xlu0 %v2159
    %v2256 = vpop.xlane.xlu0 %2255
    %2257 = vadd.xlane.f32.xlu0 %v2160
    %v2258 = vpop.xlane.xlu0 %2257
    %2259 = vadd.xlane.f32.xlu0 %v2161
    %v2260 = vpop.xlane.xlu0 %2259
    %2261 = vadd.xlane.f32.xlu0 %v2162
    %v2262 = vpop.xlane.xlu0 %2261
    %2263 = vadd.xlane.f32.xlu0 %v2163
    %v2264 = vpop.xlane.xlu0 %2263
    %2265 = vadd.xlane.f32.xlu0 %v2164
    %v2266 = vpop.xlane.xlu0 %2265
    %2267 = vadd.xlane.f32.xlu0 %v2165
    %v2268 = vpop.xlane.xlu0 %2267
    %2269 = vadd.xlane.f32.xlu0 %v2166
    %v2270 = vpop.xlane.xlu0 %2269
    %2271 = vadd.xlane.f32.xlu0 %v2167
    %v2272 = vpop.xlane.xlu0 %2271
    %2273 = vadd.xlane.f32.xlu0 %v2168
    %v2274 = vpop.xlane.xlu0 %2273
    %2275 = vadd.xlane.f32.xlu0 %v2169
    %v2276 = vpop.xlane.xlu0 %2275
    %2277 = vadd.xlane.f32.xlu0 %v2170
    %v2278 = vpop.xlane.xlu0 %2277
    %2279 = vadd.xlane.f32.xlu0 %v2171
    %v2280 = vpop.xlane.xlu0 %2279
    %2281 = vadd.xlane.f32.xlu0 %v2172
    %v2282 = vpop.xlane.xlu0 %2281
    %2283 = vadd.xlane.f32.xlu0 %v2173
    %v2284 = vpop.xlane.xlu0 %2283
    %2285 = vadd.xlane.f32.xlu0 %v2174
    %v2286 = vpop.xlane.xlu0 %2285
    %2287 = vadd.xlane.f32.xlu0 %v2175
    %v2288 = vpop.xlane.xlu0 %2287
    %2289 = vadd.xlane.f32.xlu0 %v2176
    %v2290 = vpop.xlane.xlu0 %2289
    %2291 = vadd.xlane.f32.xlu0 %v2177
    %v2292 = vpop.xlane.xlu0 %2291
    %2293 = vadd.xlane.f32.xlu0 %v2178
    %v2294 = vpop.xlane.xlu0 %2293
    %2295 = vadd.xlane.f32.xlu0 %v2179
    %v2296 = vpop.xlane.xlu0 %2295
    %2297 = vadd.xlane.f32.xlu0 %v2180
    %v2298 = vpop.xlane.xlu0 %2297
    %2299 = vadd.xlane.f32.xlu0 %v2181
    %v2300 = vpop.xlane.xlu0 %2299
    %2301 = vadd.xlane.f32.xlu0 %v2182
    %v2302 = vpop.xlane.xlu0 %2301
    %2303 = vadd.xlane.f32.xlu0 %v2183
    %v2304 = vpop.xlane.xlu0 %2303
    %2305 = vadd.xlane.f32.xlu0 %v2184
    %v2306 = vpop.xlane.xlu0 %2305
    %2307 = vadd.xlane.f32.xlu0 %v2185
    %v2308 = vpop.xlane.xlu0 %2307
    %2309 = vadd.xlane.f32.xlu0 %v2186
    %v2310 = vpop.xlane.xlu0 %2309
    %2311 = vadd.xlane.f32.xlu0 %v2187
    %v2312 = vpop.xlane.xlu0 %2311
    %2313 = vadd.xlane.f32.xlu0 %v2188
    %v2314 = vpop.xlane.xlu0 %2313
    %2315 = vadd.xlane.f32.xlu0 %v2189
    %v2316 = vpop.xlane.xlu0 %2315
    %2317 = vadd.xlane.f32.xlu0 %v2190
    %v2318 = vpop.xlane.xlu0 %2317
    %v2319 = vld [vmem:[%s3] sm:$0xff]
    %v2320 = vld [vmem:[%s3 + $0x8] sm:$0xff]
    %v2321 = vld [vmem:[%s3 + $0x10] sm:$0xff]
    %v2322 = vld [vmem:[%s3 + $0x18] sm:$0xff]
    %v2323 = vld [vmem:[%s4] sm:$0x1]
    %v2325 = vlaneseq
    %v2326 = vshrl.u32 %v2325, 7
    %v2327 = vsub.s32 0, %v2326
    %v2328 = vrot.slane %v2323, %v2327
    %v2394 = vlaneseq
    %v2395 = vand.u32 %v2394, 127
    %v2396 = vlaneseq
    %v2397 = vshrl.u32 %v2396, 7
    %v2398 = vsub.s32 %v2395, %v2397
    %v2399 = vrot.slane %v2192, %v2398
    %v2400 = vadd.s32 %v2395, 4294967288
    %v2401 = vlaneseq
    %v2402 = vshrl.u32 %v2401, 7
    %v2403 = vsub.s32 %v2400, %v2402
    %v2404 = vrot.slane %v2194, %v2403
    %vm2405 = vcmask 130112
    %v2406 = vsel %vm2405, %v2404, %v2399
    %v2407 = vadd.s32 %v2395, 4294967280
    %v2408 = vlaneseq
    %v2409 = vshrl.u32 %v2408, 7
    %v2410 = vsub.s32 %v2407, %v2409
    %v2411 = vrot.slane %v2196, %v2410
    %vm2412 = vcmask 195712
    %v2413 = vsel %vm2412, %v2411, %v2406
    %v2414 = vadd.s32 %v2395, 4294967272
    %v2415 = vlaneseq
    %v2416 = vshrl.u32 %v2415, 7
    %v2417 = vsub.s32 %v2414, %v2416
    %v2418 = vrot.slane %v2198, %v2417
    %vm2419 = vcmask 261312
    %v2420 = vsel %vm2419, %v2418, %v2413
    %v2421 = vlaneseq
    %v2422 = vshrl.u32 %v2421, 7
    %v2423 = vsub.s32 %v2395, %v2422
    %v2424 = vrot.slane %v2200, %v2423
    %v2425 = vlaneseq
    %v2426 = vshrl.u32 %v2425, 7
    %v2427 = vsub.s32 %v2400, %v2426
    %v2428 = vrot.slane %v2202, %v2427
    %v2429 = vsel %vm2405, %v2428, %v2424
    %v2430 = vlaneseq
    %v2431 = vshrl.u32 %v2430, 7
    %v2432 = vsub.s32 %v2407, %v2431
    %v2433 = vrot.slane %v2204, %v2432
    %v2434 = vsel %vm2412, %v2433, %v2429
    %v2435 = vlaneseq
    %v2436 = vshrl.u32 %v2435, 7
    %v2437 = vsub.s32 %v2414, %v2436
    %v2438 = vrot.slane %v2206, %v2437
    %v2439 = vsel %vm2419, %v2438, %v2434
    %v2440 = vlaneseq
    %v2441 = vshrl.u32 %v2440, 7
    %v2442 = vsub.s32 %v2395, %v2441
    %v2443 = vrot.slane %v2208, %v2442
    %v2444 = vlaneseq
    %v2445 = vshrl.u32 %v2444, 7
    %v2446 = vsub.s32 %v2400, %v2445
    %v2447 = vrot.slane %v2210, %v2446
    %v2448 = vsel %vm2405, %v2447, %v2443
    %v2449 = vlaneseq
    %v2450 = vshrl.u32 %v2449, 7
    %v2451 = vsub.s32 %v2407, %v2450
    %v2452 = vrot.slane %v2212, %v2451
    %v2453 = vsel %vm2412, %v2452, %v2448
    %v2454 = vlaneseq
    %v2455 = vshrl.u32 %v2454, 7
    %v2456 = vsub.s32 %v2414, %v2455
    %v2457 = vrot.slane %v2214, %v2456
    %v2458 = vsel %vm2419, %v2457, %v2453
    %v2459 = vlaneseq
    %v2460 = vshrl.u32 %v2459, 7
    %v2461 = vsub.s32 %v2395, %v2460
    %v2462 = vrot.slane %v2216, %v2461
    %v2463 = vlaneseq
    %v2464 = vshrl.u32 %v2463, 7
    %v2465 = vsub.s32 %v2400, %v2464
    %v2466 = vrot.slane %v2218, %v2465
    %v2467 = vsel %vm2405, %v2466, %v2462
    %v2468 = vlaneseq
    %v2469 = vshrl.u32 %v2468, 7
    %v2470 = vsub.s32 %v2407, %v2469
    %v2471 = vrot.slane %v2220, %v2470
    %v2472 = vsel %vm2412, %v2471, %v2467
    %v2473 = vlaneseq
    %v2474 = vshrl.u32 %v2473, 7
    %v2475 = vsub.s32 %v2414, %v2474
    %v2476 = vrot.slane %v2222, %v2475
    %v2477 = vsel %vm2419, %v2476, %v2472
    %v2478 = vlaneseq
    %v2479 = vshrl.u32 %v2478, 7
    %v2480 = vsub.s32 %v2395, %v2479
    %v2481 = vrot.slane %v2224, %v2480
    %v2482 = vlaneseq
    %v2483 = vshrl.u32 %v2482, 7
    %v2484 = vsub.s32 %v2400, %v2483
    %v2485 = vrot.slane %v2226, %v2484
    %v2486 = vsel %vm2405, %v2485, %v2481
    %v2487 = vlaneseq
    %v2488 = vshrl.u32 %v2487, 7
    %v2489 = vsub.s32 %v2407, %v2488
    %v2490 = vrot.slane %v2228, %v2489
    %v2491 = vsel %vm2412, %v2490, %v2486
    %v2492 = vlaneseq
    %v2493 = vshrl.u32 %v2492, 7
    %v2494 = vsub.s32 %v2414, %v2493
    %v2495 = vrot.slane %v2230, %v2494
    %v2496 = vsel %vm2419, %v2495, %v2491
    %v2497 = vlaneseq
    %v2498 = vshrl.u32 %v2497, 7
    %v2499 = vsub.s32 %v2395, %v2498
    %v2500 = vrot.slane %v2232, %v2499
    %v2501 = vlaneseq
    %v2502 = vshrl.u32 %v2501, 7
    %v2503 = vsub.s32 %v2400, %v2502
    %v2504 = vrot.slane %v2234, %v2503
    %v2505 = vsel %vm2405, %v2504, %v2500
    %v2506 = vlaneseq
    %v2507 = vshrl.u32 %v2506, 7
    %v2508 = vsub.s32 %v2407, %v2507
    %v2509 = vrot.slane %v2236, %v2508
    %v2510 = vsel %vm2412, %v2509, %v2505
    %v2511 = vlaneseq
    %v2512 = vshrl.u32 %v2511, 7
    %v2513 = vsub.s32 %v2414, %v2512
    %v2514 = vrot.slane %v2238, %v2513
    %v2515 = vsel %vm2419, %v2514, %v2510
    %v2516 = vlaneseq
    %v2517 = vshrl.u32 %v2516, 7
    %v2518 = vsub.s32 %v2395, %v2517
    %v2519 = vrot.slane %v2240, %v2518
    %v2520 = vlaneseq
    %v2521 = vshrl.u32 %v2520, 7
    %v2522 = vsub.s32 %v2400, %v2521
    %v2523 = vrot.slane %v2242, %v2522
    %v2524 = vsel %vm2405, %v2523, %v2519
    %v2525 = vlaneseq
    %v2526 = vshrl.u32 %v2525, 7
    %v2527 = vsub.s32 %v2407, %v2526
    %v2528 = vrot.slane %v2244, %v2527
    %v2529 = vsel %vm2412, %v2528, %v2524
    %v2530 = vlaneseq
    %v2531 = vshrl.u32 %v2530, 7
    %v2532 = vsub.s32 %v2414, %v2531
    %v2533 = vrot.slane %v2246, %v2532
    %v2534 = vsel %vm2419, %v2533, %v2529
    %v2535 = vlaneseq
    %v2536 = vshrl.u32 %v2535, 7
    %v2537 = vsub.s32 %v2395, %v2536
    %v2538 = vrot.slane %v2248, %v2537
    %v2539 = vlaneseq
    %v2540 = vshrl.u32 %v2539, 7
    %v2541 = vsub.s32 %v2400, %v2540
    %v2542 = vrot.slane %v2250, %v2541
    %v2543 = vsel %vm2405, %v2542, %v2538
    %v2544 = vlaneseq
    %v2545 = vshrl.u32 %v2544, 7
    %v2546 = vsub.s32 %v2407, %v2545
    %v2547 = vrot.slane %v2252, %v2546
    %v2548 = vsel %vm2412, %v2547, %v2543
    %v2549 = vlaneseq
    %v2550 = vshrl.u32 %v2549, 7
    %v2551 = vsub.s32 %v2414, %v2550
    %v2552 = vrot.slane %v2254, %v2551
    %v2553 = vsel %vm2419, %v2552, %v2548
    %v2554 = vlaneseq
    %v2555 = vshrl.u32 %v2554, 7
    %v2556 = vsub.s32 %v2395, %v2555
    %v2557 = vrot.slane %v2256, %v2556
    %v2558 = vlaneseq
    %v2559 = vshrl.u32 %v2558, 7
    %v2560 = vsub.s32 %v2400, %v2559
    %v2561 = vrot.slane %v2258, %v2560
    %v2562 = vsel %vm2405, %v2561, %v2557
    %v2563 = vlaneseq
    %v2564 = vshrl.u32 %v2563, 7
    %v2565 = vsub.s32 %v2407, %v2564
    %v2566 = vrot.slane %v2260, %v2565
    %v2567 = vsel %vm2412, %v2566, %v2562
    %v2568 = vlaneseq
    %v2569 = vshrl.u32 %v2568, 7
    %v2570 = vsub.s32 %v2414, %v2569
    %v2571 = vrot.slane %v2262, %v2570
    %v2572 = vsel %vm2419, %v2571, %v2567
    %v2573 = vlaneseq
    %v2574 = vshrl.u32 %v2573, 7
    %v2575 = vsub.s32 %v2395, %v2574
    %v2576 = vrot.slane %v2264, %v2575
    %v2577 = vlaneseq
    %v2578 = vshrl.u32 %v2577, 7
    %v2579 = vsub.s32 %v2400, %v2578
    %v2580 = vrot.slane %v2266, %v2579
    %v2581 = vsel %vm2405, %v2580, %v2576
    %v2582 = vlaneseq
    %v2583 = vshrl.u32 %v2582, 7
    %v2584 = vsub.s32 %v2407, %v2583
    %v2585 = vrot.slane %v2268, %v2584
    %v2586 = vsel %vm2412, %v2585, %v2581
    %v2587 = vlaneseq
    %v2588 = vshrl.u32 %v2587, 7
    %v2589 = vsub.s32 %v2414, %v2588
    %v2590 = vrot.slane %v2270, %v2589
    %v2591 = vsel %vm2419, %v2590, %v2586
    %v2592 = vlaneseq
    %v2593 = vshrl.u32 %v2592, 7
    %v2594 = vsub.s32 %v2395, %v2593
    %v2595 = vrot.slane %v2272, %v2594
    %v2596 = vlaneseq
    %v2597 = vshrl.u32 %v2596, 7
    %v2598 = vsub.s32 %v2400, %v2597
    %v2599 = vrot.slane %v2274, %v2598
    %v2600 = vsel %vm2405, %v2599, %v2595
    %v2601 = vlaneseq
    %v2602 = vshrl.u32 %v2601, 7
    %v2603 = vsub.s32 %v2407, %v2602
    %v2604 = vrot.slane %v2276, %v2603
    %v2605 = vsel %vm2412, %v2604, %v2600
    %v2606 = vlaneseq
    %v2607 = vshrl.u32 %v2606, 7
    %v2608 = vsub.s32 %v2414, %v2607
    %v2609 = vrot.slane %v2278, %v2608
    %v2610 = vsel %vm2419, %v2609, %v2605
    %v2611 = vlaneseq
    %v2612 = vshrl.u32 %v2611, 7
    %v2613 = vsub.s32 %v2395, %v2612
    %v2614 = vrot.slane %v2280, %v2613
    %v2615 = vlaneseq
    %v2616 = vshrl.u32 %v2615, 7
    %v2617 = vsub.s32 %v2400, %v2616
    %v2618 = vrot.slane %v2282, %v2617
    %v2619 = vsel %vm2405, %v2618, %v2614
    %v2620 = vlaneseq
    %v2621 = vshrl.u32 %v2620, 7
    %v2622 = vsub.s32 %v2407, %v2621
    %v2623 = vrot.slane %v2284, %v2622
    %v2624 = vsel %vm2412, %v2623, %v2619
    %v2625 = vlaneseq
    %v2626 = vshrl.u32 %v2625, 7
    %v2627 = vsub.s32 %v2414, %v2626
    %v2628 = vrot.slane %v2286, %v2627
    %v2629 = vsel %vm2419, %v2628, %v2624
    %v2630 = vlaneseq
    %v2631 = vshrl.u32 %v2630, 7
    %v2632 = vsub.s32 %v2395, %v2631
    %v2633 = vrot.slane %v2288, %v2632
    %v2634 = vlaneseq
    %v2635 = vshrl.u32 %v2634, 7
    %v2636 = vsub.s32 %v2400, %v2635
    %v2637 = vrot.slane %v2290, %v2636
    %v2638 = vsel %vm2405, %v2637, %v2633
    %v2639 = vlaneseq
    %v2640 = vshrl.u32 %v2639, 7
    %v2641 = vsub.s32 %v2407, %v2640
    %v2642 = vrot.slane %v2292, %v2641
    %v2643 = vsel %vm2412, %v2642, %v2638
    %v2644 = vlaneseq
    %v2645 = vshrl.u32 %v2644, 7
    %v2646 = vsub.s32 %v2414, %v2645
    %v2647 = vrot.slane %v2294, %v2646
    %v2648 = vsel %vm2419, %v2647, %v2643
    %v2649 = vlaneseq
    %v2650 = vshrl.u32 %v2649, 7
    %v2651 = vsub.s32 %v2395, %v2650
    %v2652 = vrot.slane %v2296, %v2651
    %v2653 = vlaneseq
    %v2654 = vshrl.u32 %v2653, 7
    %v2655 = vsub.s32 %v2400, %v2654
    %v2656 = vrot.slane %v2298, %v2655
    %v2657 = vsel %vm2405, %v2656, %v2652
    %v2658 = vlaneseq
    %v2659 = vshrl.u32 %v2658, 7
    %v2660 = vsub.s32 %v2407, %v2659
    %v2661 = vrot.slane %v2300, %v2660
    %v2662 = vsel %vm2412, %v2661, %v2657
    %v2663 = vlaneseq
    %v2664 = vshrl.u32 %v2663, 7
    %v2665 = vsub.s32 %v2414, %v2664
    %v2666 = vrot.slane %v2302, %v2665
    %v2667 = vsel %vm2419, %v2666, %v2662
    %v2668 = vlaneseq
    %v2669 = vshrl.u32 %v2668, 7
    %v2670 = vsub.s32 %v2395, %v2669
    %v2671 = vrot.slane %v2304, %v2670
    %v2672 = vlaneseq
    %v2673 = vshrl.u32 %v2672, 7
    %v2674 = vsub.s32 %v2400, %v2673
    %v2675 = vrot.slane %v2306, %v2674
    %v2676 = vsel %vm2405, %v2675, %v2671
    %v2677 = vlaneseq
    %v2678 = vshrl.u32 %v2677, 7
    %v2679 = vsub.s32 %v2407, %v2678
    %v2680 = vrot.slane %v2308, %v2679
    %v2681 = vsel %vm2412, %v2680, %v2676
    %v2682 = vlaneseq
    %v2683 = vshrl.u32 %v2682, 7
    %v2684 = vsub.s32 %v2414, %v2683
    %v2685 = vrot.slane %v2310, %v2684
    %v2686 = vsel %vm2419, %v2685, %v2681
    %v2687 = vlaneseq
    %v2688 = vshrl.u32 %v2687, 7
    %v2689 = vsub.s32 %v2395, %v2688
    %v2690 = vrot.slane %v2312, %v2689
    %v2691 = vlaneseq
    %v2692 = vshrl.u32 %v2691, 7
    %v2693 = vsub.s32 %v2400, %v2692
    %v2694 = vrot.slane %v2314, %v2693
    %v2695 = vsel %vm2405, %v2694, %v2690
    %v2696 = vlaneseq
    %v2697 = vshrl.u32 %v2696, 7
    %v2698 = vsub.s32 %v2407, %v2697
    %v2699 = vrot.slane %v2316, %v2698
    %v2700 = vsel %vm2412, %v2699, %v2695
    %v2701 = vlaneseq
    %v2702 = vshrl.u32 %v2701, 7
    %v2703 = vsub.s32 %v2414, %v2702
    %v2704 = vrot.slane %v2318, %v2703
    %v2705 = vsel %vm2419, %v2704, %v2700
    %vm2706 = vcmask 1041409
    %v2707 = vsel %vm2706, %v2439, %v2420
    %vm2708 = vcmask 1042434
    %v2709 = vsel %vm2708, %v2458, %v2707
    %vm2710 = vcmask 1043459
    %v2711 = vsel %vm2710, %v2477, %v2709
    %vm2712 = vcmask 1044484
    %v2713 = vsel %vm2712, %v2496, %v2711
    %vm2714 = vcmask 1045509
    %v2715 = vsel %vm2714, %v2515, %v2713
    %vm2716 = vcmask 1046534
    %v2717 = vsel %vm2716, %v2534, %v2715
    %vm2718 = vcmask 1047559
    %v2719 = vsel %vm2718, %v2553, %v2717
    %v2720 = vsel %vm2706, %v2591, %v2572
    %v2721 = vsel %vm2708, %v2610, %v2720
    %v2722 = vsel %vm2710, %v2629, %v2721
    %v2723 = vsel %vm2712, %v2648, %v2722
    %v2724 = vsel %vm2714, %v2667, %v2723
    %v2725 = vsel %vm2716, %v2686, %v2724
    %v2726 = vsel %vm2718, %v2705, %v2725
    %vm2727 = vcmask 261120
    %v2728 = vsel %vm2727, %v2719, 0
    %v2730 = vsel %vm2727, %v2726, 0
    %2732 = vmatprep.subr.mxu0 0.0
    %2733 = vmatpush1.msra.mxu0 0.0
    %2734 = vmatprep.subr.mxu0 0.0
    %2735 = vmatpush1.msra.mxu0 0.0
    %2736 = vmatprep.subr.mxu0 0.0
    %2737 = vmatpush1.msra.mxu0 0.0
    %2738 = vmatprep.subr.mxu0 0.0
    %2739 = vmatpush1.msra.mxu0 0.0
    %2740 = vmatprep.subr.mxu0 0.0
    %2741 = vmatpush1.msra.mxu0 0.0
    %2742 = vmatprep.subr.mxu0 0.0
    %2743 = vmatpush1.msra.mxu0 0.0
    %2744 = vmatprep.subr.mxu0 0.0
    %2745 = vmatpush1.msra.mxu0 0.0
    %2746 = vmatprep.subr.mxu0 0.0
    %2747 = vmatpush1.msra.mxu0 0.0
    %2748 = vmatprep.subr.mxu0 0.0
    %2749 = vmatpush1.msra.mxu0 0.0
    %2750 = vmatprep.subr.mxu0 0.0
    %2751 = vmatpush1.msra.mxu0 0.0
    %2752 = vmatprep.subr.mxu0 0.0
    %2753 = vmatpush1.msra.mxu0 0.0
    %2754 = vmatprep.subr.mxu0 0.0
    %2755 = vmatpush1.msra.mxu0 0.0
    %2756 = vmatprep.subr.mxu0 0.0
    %2757 = vmatpush1.msra.mxu0 %v2322
    %2758 = vmatprep.subr.mxu0 0.0
    %2759 = vmatpush1.msra.mxu0 %v2321
    %2760 = vmatprep.subr.mxu0 0.0
    %2761 = vmatpush1.msra.mxu0 %v2320
    %2762 = vmatprep.subr.mxu0 0.0
    %2763 = vmatpush1.msra.mxu0 %v2319
    %2764 = vmatprep.subr.mxu0 0.0
    %2765 = vmatpush2.msra.mxu0 0.0
    %2766 = vmatprep.subr.mxu0 0.0
    %2767 = vmatpush2.msra.mxu0 0.0
    %2768 = vmatprep.subr.mxu0 0.0
    %2769 = vmatpush2.msra.mxu0 0.0
    %2770 = vmatprep.subr.mxu0 0.0
    %2771 = vmatpush2.msra.mxu0 0.0
    %2772 = vmatprep.subr.mxu0 0.0
    %2773 = vmatpush2.msra.mxu0 0.0
    %2774 = vmatprep.subr.mxu0 0.0
    %2775 = vmatpush2.msra.mxu0 0.0
    %2776 = vmatprep.subr.mxu0 0.0
    %2777 = vmatpush2.msra.mxu0 0.0
    %2778 = vmatprep.subr.mxu0 0.0
    %2779 = vmatpush2.msra.mxu0 0.0
    %2780 = vmatprep.subr.mxu0 0.0
    %2781 = vmatpush2.msra.mxu0 0.0
    %2782 = vmatprep.subr.mxu0 0.0
    %2783 = vmatpush2.msra.mxu0 0.0
    %2784 = vmatprep.subr.mxu0 0.0
    %2785 = vmatpush2.msra.mxu0 0.0
    %2786 = vmatprep.subr.mxu0 0.0
    %2787 = vmatpush2.msra.mxu0 0.0
    %2788 = vmatprep.subr.mxu0 0.0
    %2789 = vmatpush2.msra.mxu0 0.0
    %2790 = vmatprep.subr.mxu0 0.0
    %2791 = vmatpush2.msra.mxu0 0.0
    %2792 = vmatprep.subr.mxu0 0.0
    %2793 = vmatpush2.msra.mxu0 0.0
    %2794 = vmatprep.subr.mxu0 0.0
    %2795 = vmatpush2.msra.mxu0 0.0
    %2796 = vmatprep.mubr.f32.mxu0 0.0
    %2797 = vmatmul.mubr.f32.gmra.mxu0 %v2728
    %v2798 = vpop.f32.mrf.mxu0
    %v2799 = vadd.f32 %v2328, %v2798
    %v2800 = vpop.f32.mrf.mxu0
    %2801 = vmatprep.mubr.f32.mxu0 0.0
    %2802 = vmatmul.mubr.f32.gmra.mxu0 %v2730
    %v2803 = vpop.f32.mrf.mxu0
    %v2804 = vadd.f32 %v2328, %v2803
    %v2805 = vpop.f32.mrf.mxu0
    %2806 = vdwg.mxu0
    %v2807 = vmul.f32 %v2799, %v2799
    %v2808 = vmul.f32 %v2804, %v2804
    %v2809 = vsel %vm2727, %v2807, 0.0
    %2810 = vadd.xlane.f32.xlu0 %v2809
    %v2811 = vpop.xlane.xlu0 %2810
    %v2812 = vsel %vm2727, %v2808, 0.0
    %2813 = vadd.xlane.f32.xlu0 %v2812
    %v2814 = vpop.xlane.xlu0 %2813
    %v2816 = vsel %vm2727, %v2799, 0
    %v2819 = vsel %vm2727, %v2804, 0
    %2821 = vmatprep.subr.mxu0 0.0
    %2822 = vmatpush1.xpose.msra.mxu0 0.0
    %2823 = vmatprep.subr.mxu0 0.0
    %2824 = vmatpush1.xpose.msra.mxu0 0.0
    %2825 = vmatprep.subr.mxu0 0.0
    %2826 = vmatpush1.xpose.msra.mxu0 0.0
    %2827 = vmatprep.subr.mxu0 0.0
    %2828 = vmatpush1.xpose.msra.mxu0 0.0
    %2829 = vmatprep.subr.mxu0 0.0
    %2830 = vmatpush1.xpose.msra.mxu0 0.0
    %2831 = vmatprep.subr.mxu0 0.0
    %2832 = vmatpush1.xpose.msra.mxu0 0.0
    %2833 = vmatprep.subr.mxu0 0.0
    %2834 = vmatpush1.xpose.msra.mxu0 0.0
    %2835 = vmatprep.subr.mxu0 0.0
    %2836 = vmatpush1.xpose.msra.mxu0 0.0
    %2837 = vmatprep.subr.mxu0 0.0
    %2838 = vmatpush1.xpose.msra.mxu0 0.0
    %2839 = vmatprep.subr.mxu0 0.0
    %2840 = vmatpush1.xpose.msra.mxu0 0.0
    %2841 = vmatprep.subr.mxu0 0.0
    %2842 = vmatpush1.xpose.msra.mxu0 0.0
    %2843 = vmatprep.subr.mxu0 0.0
    %2844 = vmatpush1.xpose.msra.mxu0 0.0
    %2845 = vmatprep.subr.mxu0 0.0
    %2846 = vmatpush1.xpose.msra.mxu0 0.0
    %2847 = vmatprep.subr.mxu0 0.0
    %2848 = vmatpush1.xpose.msra.mxu0 0.0
    %2849 = vmatprep.subr.mxu0 0.0
    %2850 = vmatpush1.xpose.msra.mxu0 0.0
    %2851 = vmatprep.subr.mxu0 0.0
    %2852 = vmatpush1.xpose.msra.mxu0 %v2819
    %2853 = vmatprep.subr.mxu0 0.0
    %2854 = vmatpush2.xpose.msra.mxu0 0.0
    %2855 = vmatprep.subr.mxu0 0.0
    %2856 = vmatpush2.xpose.msra.mxu0 0.0
    %2857 = vmatprep.subr.mxu0 0.0
    %2858 = vmatpush2.xpose.msra.mxu0 0.0
    %2859 = vmatprep.subr.mxu0 0.0
    %2860 = vmatpush2.xpose.msra.mxu0 0.0
    %2861 = vmatprep.subr.mxu0 0.0
    %2862 = vmatpush2.xpose.msra.mxu0 0.0
    %2863 = vmatprep.subr.mxu0 0.0
    %2864 = vmatpush2.xpose.msra.mxu0 0.0
    %2865 = vmatprep.subr.mxu0 0.0
    %2866 = vmatpush2.xpose.msra.mxu0 0.0
    %2867 = vmatprep.subr.mxu0 0.0
    %2868 = vmatpush2.xpose.msra.mxu0 0.0
    %2869 = vmatprep.subr.mxu0 0.0
    %2870 = vmatpush2.xpose.msra.mxu0 0.0
    %2871 = vmatprep.subr.mxu0 0.0
    %2872 = vmatpush2.xpose.msra.mxu0 0.0
    %2873 = vmatprep.subr.mxu0 0.0
    %2874 = vmatpush2.xpose.msra.mxu0 0.0
    %2875 = vmatprep.subr.mxu0 0.0
    %2876 = vmatpush2.xpose.msra.mxu0 0.0
    %2877 = vmatprep.subr.mxu0 0.0
    %2878 = vmatpush2.xpose.msra.mxu0 0.0
    %2879 = vmatprep.subr.mxu0 0.0
    %2880 = vmatpush2.xpose.msra.mxu0 0.0
    %2881 = vmatprep.subr.mxu0 0.0
    %2882 = vmatpush2.xpose.msra.mxu0 0.0
    %2883 = vmatprep.subr.mxu0 0.0
    %2884 = vmatpush2.xpose.msra.mxu0 0.0
    %2885 = vmatprep.mubr.f32.mxu0 0.0
    %2886 = vmatmul.mubr.f32.gmra.mxu0 %v2816
    %v2887 = vpop.f32.mrf.mxu0
    %v2888 = vadd.f32 0.0, %v2887
    %v2889 = vpop.f32.mrf.mxu0
    %2890 = vdwg.mxu0
    %2891 = vxpose.xlu0.b32.start [1/16] %v2814, 128
    %2892 = vxpose.xlu0.b32.cont [2/16] 0.0, 128
    %2893 = vxpose.xlu0.b32.cont [3/16] 0.0, 128
    %2894 = vxpose.xlu0.b32.cont [4/16] 0.0, 128
    %2895 = vxpose.xlu0.b32.cont [5/16] 0.0, 128
    %2896 = vxpose.xlu0.b32.cont [6/16] 0.0, 128
    %2897 = vxpose.xlu0.b32.cont [7/16] 0.0, 128
    %2898 = vxpose.xlu0.b32.cont [8/16] 0.0, 128
    %2899 = vxpose.xlu0.b32.cont [9/16] 0.0, 128
    %2900 = vxpose.xlu0.b32.cont [10/16] 0.0, 128
    %2901 = vxpose.xlu0.b32.cont [11/16] 0.0, 128
    %2902 = vxpose.xlu0.b32.cont [12/16] 0.0, 128
    %2903 = vxpose.xlu0.b32.cont [13/16] 0.0, 128
    %2904 = vxpose.xlu0.b32.cont [14/16] 0.0, 128
    %2905 = vxpose.xlu0.b32.cont [15/16] 0.0, 128
    %2906 = vxpose.xlu0.b32.end [16/16] 0.0, 128
    %v2907 = vpop.trf.xlu0
    %v2908 = vpop.trf.xlu0
    %v2909 = vpop.trf.xlu0
    %v2910 = vpop.trf.xlu0
    %v2911 = vpop.trf.xlu0
    %v2912 = vpop.trf.xlu0
    %v2913 = vpop.trf.xlu0
    %v2914 = vpop.trf.xlu0
    %v2915 = vpop.trf.xlu0
    %v2916 = vpop.trf.xlu0
    %v2917 = vpop.trf.xlu0
    %v2918 = vpop.trf.xlu0
    %v2919 = vpop.trf.xlu0
    %v2920 = vpop.trf.xlu0
    %v2921 = vpop.trf.xlu0
    %v2922 = vpop.trf.xlu0
    %v2923 = vlaneseq
    %v2924 = vshrl.u32 %v2923, 7
    %v2925 = vsub.s32 0, %v2924
    %v2926 = vrot.slane %v2907, %v2925
    %v2927 = vadd.f32 %v2811, %v2926
    %v2928 = vmul.f32 %v2888, 2.0
    %v2929 = vsub.f32 %v2927, %v2928
    %v2930 = vmax.f32 %v2929, 0.0
    %v2931 = vrsqrt.pop %v2930
    %v2932 = vmul.f32 %v2930, %v2931
    %vm2933 = vcmp.eq.f32.partialorder %v2930, inf
    %v2934 = vsel %vm2933, %v2930, %v2932
    %vm2935 = vcmp.eq.f32.partialorder %v2930, 0.0
    %v2936 = vand.u32 %v2930, 2147483648
    %v2937 = vsel %vm2935, %v2936, %v2934
    %vm2938 = vcmask 64512
    %v2939 = vsel %vm2938, %v2937, inf
    %2940 = vmin.xlane.f32.xlu0 %v2939
    %v2941 = vpop.xlane.xlu0 %2940
    %v2942 = vrot.slane %v2941, 4
    %v2943 = vmin.f32 %v2941, %v2942
    %v2944 = vrot.slane %v2943, 2
    %v2945 = vmin.f32 %v2943, %v2944
    %v2946 = vrot.slane %v2945, 1
    %v2947 = vmin.f32 %v2945, %v2946
    %s2948 = vtos %v2947
    %v2949 = vstv %s2948
    %v2950 = vsel %vm2938, %v2937, -inf
    %2951 = vmax.xlane.f32.xlu0 %v2950
    %v2952 = vpop.xlane.xlu0 %2951
    %v2953 = vrot.slane %v2952, 4
    %v2954 = vmax.f32 %v2952, %v2953
    %v2955 = vrot.slane %v2954, 2
    %v2956 = vmax.f32 %v2954, %v2955
    %v2957 = vrot.slane %v2956, 1
    %v2958 = vmax.f32 %v2956, %v2957
    %s2959 = vtos %v2958
    %v2960 = vstv %s2959
    %v2961 = vsub.f32 %v2937, %v2949
    %v2962 = vsub.f32 %v2960, %v2949
    %v2963 = vrcp.pop %v2962
    %v2964 = vmul.f32 %v2961, %v2963
    %2965 = vst.msk [vmem:[#allocation2] sm:$0xff] %vm2938, %v2964
    // Predicated region
    $region22: #{frechet_distance_softmax_forward.1} parent=1 // pred_check
      _
    $region23: #{frechet_distance_softmax_forward.1} parent=1 // pred_check_branch
      %2967 = sbr.rel (0) target = $region25
    $region24: #{frechet_distance_softmax_forward.1} parent=1 // pred_region
      %s2969 = ssub.s32 128, 128
      %2970 = vsyncadd [#allocation3], %s2969
      %s2972 = sshll.u32 [#allocation2], 4
      %s2973 = int_to_ptr.vmem [resolvable:$true] %s2972
      %2975 = dma.vmem_to_hbm [thread:$0]  %s2973, 128, %s5, [#allocation3]
    $region25: #{frechet_distance_softmax_forward.1} parent=1 // pred_fallthru
      _
    // Predicated region
    $region26: #{frechet_distance_softmax_forward.1} parent=1 // pred_check
      _
    $region27: #{frechet_distance_softmax_forward.1} parent=1 // pred_check_branch
      %2977 = sbr.rel (0) target = $region29
    $region28: #{frechet_distance_softmax_forward.1} parent=1 // pred_region
      %2978 = dma.done [#allocation3], 128
    $region29: #{frechet_distance_softmax_forward.1} parent=1 // pred_fallthru
      _
    %2979 = vsyncpa [#allocation3], 1

</llo_original>
